<compile_context>
chip_gen: v7x
topology: tpu7x:2x2x1
jax: 0.10.0
libtpu: 0.0.40
codegen_flags: <defaults>
</compile_context>

<pallas_src>
import jax
import jax.numpy as jnp
import numpy as np
from jax.experimental import pallas as pl
from jax.experimental.pallas import tpu as pltpu

BN_EPS = 0.2


def _fused_kernel(x_ref, wb_ref, bb_ref,
                  w1_ref, b1_ref, g1_ref, be1_ref,
                  w2_ref, b2_ref, g2_ref, be2_ref,
                  wo_ref, bo_ref, seg_ref, msk_ref,
                  out_ref):
    """Backbone stand-in + 2x(Linear+ReLU+BN1d) + 5 fused heads (softmax/sigmoid)."""
    # ---- stand-in backbone: GAP over spatial, project C->512, ReLU ----------
    # TODO(synk): replace with the real resnet_model feature extractor.
    ch_means = jnp.mean(x_ref[...], axis=2)                       # [B, C]
    feats = jnp.dot(ch_means, wb_ref[...],
                    preferred_element_type=jnp.float32) + bb_ref[...]
    feats = jnp.maximum(feats, 0.0)                               # [B, 512]

    # ---- x1 = bn1(relu(Linear(512->256)(feats))) -----------------------------
    h1 = jnp.dot(feats.astype(jnp.bfloat16), w1_ref[...],
                 preferred_element_type=jnp.float32) + b1_ref[...]
    h1 = jnp.maximum(h1, 0.0)
    mu1 = jnp.mean(h1, axis=0, keepdims=True)
    var1 = jnp.mean(h1 * h1, axis=0, keepdims=True) - mu1 * mu1   # independent reduces
    h1 = (h1 - mu1) * jax.lax.rsqrt(var1 + BN_EPS) * g1_ref[...] + be1_ref[...]

    # ---- x1 = bn2(relu(Linear(256->256)(x1))) --------------------------------
    h2 = jnp.dot(h1.astype(jnp.bfloat16), w2_ref[...],
                 preferred_element_type=jnp.float32) + b2_ref[...]
    h2 = jnp.maximum(h2, 0.0)
    mu2 = jnp.mean(h2, axis=0, keepdims=True)
    var2 = jnp.mean(h2 * h2, axis=0, keepdims=True) - mu2 * mu2
    h2 = (h2 - mu2) * jax.lax.rsqrt(var2 + BN_EPS) * g2_ref[...] + be2_ref[...]

    # ---- combined head logits [B, n_total] -----------------------------------
    logits = jnp.dot(h2.astype(jnp.bfloat16), wo_ref[...],
                     preferred_element_type=jnp.float32) + bo_ref[...]

    # ---- fused heads: one max/exp pass; per-head denom via segment matmul ----
    sm_mask = msk_ref[...] > 0.5                                  # [1, n_total]
    m = jnp.max(jnp.where(sm_mask, logits, jnp.float32(-1e30)),
                axis=1, keepdims=True)                            # one XLU max
    e = jnp.exp(logits - m)                                       # one EUP pass
    den = jnp.dot(e, seg_ref[...],
                  preferred_element_type=jnp.float32,
                  precision=jax.lax.Precision.HIGHEST)            # segment-sum on MXU
    soft = e / den                                                # exact normalization
    sig = jax.nn.sigmoid(logits)
    out_ref[...] = jnp.where(sm_mask, soft, sig)                  # single lane-dense store


def _build_head_tables(nodes):
    """Segment-sum matrix + softmax-lane mask for the fused head pass."""
    n_total = sum(nodes)
    n_sm = sum(nodes[:4])                                         # heads 0..3 are softmax
    seg = np.zeros((n_total, n_total), np.float32)
    start = 0
    for i, n in enumerate(nodes):
        end = start + n
        if i < 4:
            seg[start:end, start:end] = 1.0                       # within-head all-ones
        else:
            seg[np.arange(start, end), np.arange(start, end)] = 1.0  # identity (unused lanes)
        start = end
    msk = np.zeros((1, n_total), np.float32)
    msk[0, :n_sm] = 1.0
    return jnp.asarray(seg), jnp.asarray(msk)


def multi_output_model_forward(x_nchw, params, nodes):
    """x_nchw: [B, C, H, W] f32. Returns [B, sum(nodes)] f32."""
    B, C, H, W = x_nchw.shape
    n_total = sum(nodes)
    x3 = x_nchw.reshape(B, C, H * W)                              # free metadata reshape
    seg, msk = _build_head_tables(tuple(nodes))

    args = (
        x3, params["wb"], params["bb"],
        params["w1"], params["b1"], params["g1"], params["be1"],
        params["w2"], params["b2"], params["g2"], params["be2"],
        params["wo"], params["bo"], seg, msk,
    )
    vmem_spec = pl.BlockSpec(memory_space=pltpu.MemorySpace.VMEM)
    # Grid-less: total resident footprint ~0.5 MiB; at small B a grid only adds
    # per-step overhead. TODO(synk): add a batch-parallel grid (with full-batch
    # BN stats) once a real backbone / large B makes both TCs worth using.
    return pl.pallas_call(
        _fused_kernel,
        out_shape=jax.ShapeDtypeStruct((B, n_total), jnp.float32),
        in_specs=[vmem_spec] * len(args),
        out_specs=vmem_spec,
    )(*args)


def _xavier_normal(key, out_dim, in_dim):
    std = (2.0 / (in_dim + out_dim)) ** 0.5
    return std * jax.random.normal(key, (out_dim, in_dim), dtype=jnp.float32)


def _linear_bias(key, in_dim, out_dim):
    bound = 1.0 / (in_dim ** 0.5)
    return jax.random.uniform(key, (out_dim,), jnp.float32, -bound, bound)


def init_params(key, nodes, in_channels):
    ks = jax.random.split(key, 16)
    # PyTorch Linear stores W as [out, in]; transpose to [in, out] for the kernel.
    # Matmul weights are kept in bf16 (MXU inputs); biases / BN params stay f32.
    w1 = _xavier_normal(ks[0], 256, 512).T.astype(jnp.bfloat16)       # [512, 256]
    b1 = _linear_bias(ks[1], 512, 256).reshape(1, 256)
    w2 = _xavier_normal(ks[2], 256, 256).T.astype(jnp.bfloat16)       # [256, 256]
    b2 = _linear_bias(ks[3], 256, 256).reshape(1, 256)

    head_ws, head_bs = [], []
    for i, n in enumerate(nodes):
        head_ws.append(_xavier_normal(ks[4 + 2 * i], n, 256).T)       # [256, n]
        head_bs.append(_linear_bias(ks[5 + 2 * i], 256, n))           # [n]
    wo = jnp.concatenate(head_ws, axis=1).astype(jnp.bfloat16)        # [256, sum]
    bo = jnp.concatenate(head_bs, axis=0).reshape(1, -1)              # [1, sum]

    return {
        "w1": w1, "b1": b1,
        "g1": jnp.ones((1, 256), jnp.float32), "be1": jnp.zeros((1, 256), jnp.float32),
        "w2": w2, "b2": b2,
        "g2": jnp.ones((1, 256), jnp.float32), "be2": jnp.zeros((1, 256), jnp.float32),
        "wo": wo, "bo": bo,
        # stand-in backbone projection C -> 512 (tiny, kept in f32)
        "wb": _xavier_normal(ks[14], 512, in_channels).T,             # [C, 512]
        "bb": _linear_bias(ks[15], in_channels, 512).reshape(1, 512),
    }


if __name__ == "__main__":
    key = jax.random.PRNGKey(0)
    k_x, k_p = jax.random.split(key)

    nodes = (4, 3, 5, 2, 6)          # 5 heads; total output width = 20
    B, C, H, W = 8, 4, 16, 16        # small NCHW input (BatchNorm needs B > 1)

    x = jax.random.normal(k_x, (B, C, H, W), dtype=jnp.float32)
    params = init_params(k_p, nodes, C)

    out = multi_output_model_forward(x, params, nodes)
    out = jax.block_until_ready(out)

    assert out.shape == (B, sum(nodes)), out.shape
    # sanity: each softmax head's rows sum to ~1 (exact f32 division now)
    s = 0
    for i, n in enumerate(nodes[:4]):
        seg = out[:, s:s + n]
        assert jnp.allclose(jnp.sum(seg, axis=1), 1.0, atol=1e-3), (i, jnp.sum(seg, axis=1))
        s += n
    # sanity: sigmoid head in [0, 1]
    sig = out[:, s:]
    assert bool(jnp.all((sig >= 0.0) & (sig <= 1.0)))
    print("KERNEL_OK")
</pallas_src>

<mosaic_0001>
module attributes {stable_mosaic.version = 11 : i64} {
  func.func @_fused_kernel(%arg0: memref<8x4x256xf32, #tpu.memory_space<vmem>>, %arg1: memref<4x512xf32, #tpu.memory_space<vmem>>, %arg2: memref<1x512xf32, #tpu.memory_space<vmem>>, %arg3: memref<512x256xbf16, #tpu.memory_space<vmem>>, %arg4: memref<1x256xf32, #tpu.memory_space<vmem>>, %arg5: memref<1x256xf32, #tpu.memory_space<vmem>>, %arg6: memref<1x256xf32, #tpu.memory_space<vmem>>, %arg7: memref<256x256xbf16, #tpu.memory_space<vmem>>, %arg8: memref<1x256xf32, #tpu.memory_space<vmem>>, %arg9: memref<1x256xf32, #tpu.memory_space<vmem>>, %arg10: memref<1x256xf32, #tpu.memory_space<vmem>>, %arg11: memref<256x20xbf16, #tpu.memory_space<vmem>>, %arg12: memref<1x20xf32, #tpu.memory_space<vmem>>, %arg13: memref<20x20xf32, #tpu.memory_space<vmem>>, %arg14: memref<1x20xf32, #tpu.memory_space<vmem>>, %arg15: memref<8x20xf32, #tpu.memory_space<vmem>>) attributes {dimension_semantics = [], scalar_prefetch = 0 : i64, scratch_operands = 0 : i64, tpu.core_type = #tpu.core_type<tc>} {
    %c0 = arith.constant 0 : index
    %c0_0 = arith.constant 0 : index
    %c0_1 = arith.constant 0 : index
    %0 = vector.load %arg0[%c0, %c0_0, %c0_1] : memref<8x4x256xf32, #tpu.memory_space<vmem>>, vector<8x4x256xf32>
    %cst = arith.constant dense<0.000000e+00> : vector<8x4xf32>
    %1 = vector.multi_reduction <add>, %0, %cst [2] : vector<8x4x256xf32> to vector<8x4xf32>
    %cst_2 = arith.constant 2.560000e+02 : f32
    %2 = vector.broadcast %cst_2 : f32 to vector<8x4xf32>
    %3 = arith.divf %1, %2 : vector<8x4xf32>
    %c0_3 = arith.constant 0 : index
    %c0_4 = arith.constant 0 : index
    %4 = vector.load %arg1[%c0_3, %c0_4] : memref<4x512xf32, #tpu.memory_space<vmem>>, vector<4x512xf32>
    %cst_5 = arith.constant dense<0.000000e+00> : vector<8x512xf32>
    %5 = tpu.matmul %3, %4, %cst_5 {dimension_numbers = #tpu.dot_dimension_numbers<[1], [0], [0], [1], [0, 0, 1, 1], [], []>} : vector<8x4xf32>, vector<4x512xf32>, vector<8x512xf32> -> vector<8x512xf32>
    %c0_6 = arith.constant 0 : index
    %c0_7 = arith.constant 0 : index
    %6 = vector.load %arg2[%c0_6, %c0_7] : memref<1x512xf32, #tpu.memory_space<vmem>>, vector<1x512xf32>
    %7 = vector.broadcast %6 : vector<1x512xf32> to vector<8x512xf32>
    %8 = arith.addf %5, %7 : vector<8x512xf32>
    %cst_8 = arith.constant 0.000000e+00 : f32
    %9 = vector.broadcast %cst_8 : f32 to vector<8x512xf32>
    %10 = arith.maximumf %8, %9 : vector<8x512xf32>
    %11 = arith.truncf %10 : vector<8x512xf32> to vector<8x512xbf16>
    %c0_9 = arith.constant 0 : index
    %c0_10 = arith.constant 0 : index
    %12 = vector.load %arg3[%c0_9, %c0_10] : memref<512x256xbf16, #tpu.memory_space<vmem>>, vector<512x256xbf16>
    %cst_11 = arith.constant dense<0.000000e+00> : vector<8x256xf32>
    %13 = tpu.matmul %11, %12, %cst_11 {dimension_numbers = #tpu.dot_dimension_numbers<[1], [0], [0], [1], [0, 0, 1, 1], [], []>} : vector<8x512xbf16>, vector<512x256xbf16>, vector<8x256xf32> -> vector<8x256xf32>
    %c0_12 = arith.constant 0 : index
    %c0_13 = arith.constant 0 : index
    %14 = vector.load %arg4[%c0_12, %c0_13] : memref<1x256xf32, #tpu.memory_space<vmem>>, vector<1x256xf32>
    %15 = vector.broadcast %14 : vector<1x256xf32> to vector<8x256xf32>
    %16 = arith.addf %13, %15 : vector<8x256xf32>
    %cst_14 = arith.constant 0.000000e+00 : f32
    %17 = vector.broadcast %cst_14 : f32 to vector<8x256xf32>
    %18 = arith.maximumf %16, %17 : vector<8x256xf32>
    %cst_15 = arith.constant dense<0.000000e+00> : vector<256xf32>
    %19 = vector.multi_reduction <add>, %18, %cst_15 [0] : vector<8x256xf32> to vector<256xf32>
    %20 = vector.shape_cast %19 : vector<256xf32> to vector<1x256xf32>
    %cst_16 = arith.constant 8.000000e+00 : f32
    %21 = vector.broadcast %cst_16 : f32 to vector<1x256xf32>
    %22 = arith.divf %20, %21 : vector<1x256xf32>
    %23 = arith.mulf %18, %18 : vector<8x256xf32>
    %cst_17 = arith.constant dense<0.000000e+00> : vector<256xf32>
    %24 = vector.multi_reduction <add>, %23, %cst_17 [0] : vector<8x256xf32> to vector<256xf32>
    %25 = vector.shape_cast %24 : vector<256xf32> to vector<1x256xf32>
    %cst_18 = arith.constant 8.000000e+00 : f32
    %26 = vector.broadcast %cst_18 : f32 to vector<1x256xf32>
    %27 = arith.divf %25, %26 : vector<1x256xf32>
    %28 = arith.mulf %22, %22 : vector<1x256xf32>
    %29 = arith.subf %27, %28 : vector<1x256xf32>
    %30 = vector.broadcast %22 : vector<1x256xf32> to vector<8x256xf32>
    %31 = arith.subf %18, %30 : vector<8x256xf32>
    %cst_19 = arith.constant 2.000000e-01 : f32
    %32 = vector.broadcast %cst_19 : f32 to vector<1x256xf32>
    %33 = arith.addf %29, %32 : vector<1x256xf32>
    %34 = math.rsqrt %33 : vector<1x256xf32>
    %35 = vector.broadcast %34 : vector<1x256xf32> to vector<8x256xf32>
    %36 = arith.mulf %31, %35 : vector<8x256xf32>
    %c0_20 = arith.constant 0 : index
    %c0_21 = arith.constant 0 : index
    %37 = vector.load %arg5[%c0_20, %c0_21] : memref<1x256xf32, #tpu.memory_space<vmem>>, vector<1x256xf32>
    %38 = vector.broadcast %37 : vector<1x256xf32> to vector<8x256xf32>
    %39 = arith.mulf %36, %38 : vector<8x256xf32>
    %c0_22 = arith.constant 0 : index
    %c0_23 = arith.constant 0 : index
    %40 = vector.load %arg6[%c0_22, %c0_23] : memref<1x256xf32, #tpu.memory_space<vmem>>, vector<1x256xf32>
    %41 = vector.broadcast %40 : vector<1x256xf32> to vector<8x256xf32>
    %42 = arith.addf %39, %41 : vector<8x256xf32>
    %43 = arith.truncf %42 : vector<8x256xf32> to vector<8x256xbf16>
    %c0_24 = arith.constant 0 : index
    %c0_25 = arith.constant 0 : index
    %44 = vector.load %arg7[%c0_24, %c0_25] : memref<256x256xbf16, #tpu.memory_space<vmem>>, vector<256x256xbf16>
    %cst_26 = arith.constant dense<0.000000e+00> : vector<8x256xf32>
    %45 = tpu.matmul %43, %44, %cst_26 {dimension_numbers = #tpu.dot_dimension_numbers<[1], [0], [0], [1], [0, 0, 1, 1], [], []>} : vector<8x256xbf16>, vector<256x256xbf16>, vector<8x256xf32> -> vector<8x256xf32>
    %c0_27 = arith.constant 0 : index
    %c0_28 = arith.constant 0 : index
    %46 = vector.load %arg8[%c0_27, %c0_28] : memref<1x256xf32, #tpu.memory_space<vmem>>, vector<1x256xf32>
    %47 = vector.broadcast %46 : vector<1x256xf32> to vector<8x256xf32>
    %48 = arith.addf %45, %47 : vector<8x256xf32>
    %cst_29 = arith.constant 0.000000e+00 : f32
    %49 = vector.broadcast %cst_29 : f32 to vector<8x256xf32>
    %50 = arith.maximumf %48, %49 : vector<8x256xf32>
    %cst_30 = arith.constant dense<0.000000e+00> : vector<256xf32>
    %51 = vector.multi_reduction <add>, %50, %cst_30 [0] : vector<8x256xf32> to vector<256xf32>
    %52 = vector.shape_cast %51 : vector<256xf32> to vector<1x256xf32>
    %cst_31 = arith.constant 8.000000e+00 : f32
    %53 = vector.broadcast %cst_31 : f32 to vector<1x256xf32>
    %54 = arith.divf %52, %53 : vector<1x256xf32>
    %55 = arith.mulf %50, %50 : vector<8x256xf32>
    %cst_32 = arith.constant dense<0.000000e+00> : vector<256xf32>
    %56 = vector.multi_reduction <add>, %55, %cst_32 [0] : vector<8x256xf32> to vector<256xf32>
    %57 = vector.shape_cast %56 : vector<256xf32> to vector<1x256xf32>
    %cst_33 = arith.constant 8.000000e+00 : f32
    %58 = vector.broadcast %cst_33 : f32 to vector<1x256xf32>
    %59 = arith.divf %57, %58 : vector<1x256xf32>
    %60 = arith.mulf %54, %54 : vector<1x256xf32>
    %61 = arith.subf %59, %60 : vector<1x256xf32>
    %62 = vector.broadcast %54 : vector<1x256xf32> to vector<8x256xf32>
    %63 = arith.subf %50, %62 : vector<8x256xf32>
    %cst_34 = arith.constant 2.000000e-01 : f32
    %64 = vector.broadcast %cst_34 : f32 to vector<1x256xf32>
    %65 = arith.addf %61, %64 : vector<1x256xf32>
    %66 = math.rsqrt %65 : vector<1x256xf32>
    %67 = vector.broadcast %66 : vector<1x256xf32> to vector<8x256xf32>
    %68 = arith.mulf %63, %67 : vector<8x256xf32>
    %c0_35 = arith.constant 0 : index
    %c0_36 = arith.constant 0 : index
    %69 = vector.load %arg9[%c0_35, %c0_36] : memref<1x256xf32, #tpu.memory_space<vmem>>, vector<1x256xf32>
    %70 = vector.broadcast %69 : vector<1x256xf32> to vector<8x256xf32>
    %71 = arith.mulf %68, %70 : vector<8x256xf32>
    %c0_37 = arith.constant 0 : index
    %c0_38 = arith.constant 0 : index
    %72 = vector.load %arg10[%c0_37, %c0_38] : memref<1x256xf32, #tpu.memory_space<vmem>>, vector<1x256xf32>
    %73 = vector.broadcast %72 : vector<1x256xf32> to vector<8x256xf32>
    %74 = arith.addf %71, %73 : vector<8x256xf32>
    %75 = arith.truncf %74 : vector<8x256xf32> to vector<8x256xbf16>
    %c0_39 = arith.constant 0 : index
    %c0_40 = arith.constant 0 : index
    %76 = vector.load %arg11[%c0_39, %c0_40] : memref<256x20xbf16, #tpu.memory_space<vmem>>, vector<256x20xbf16>
    %cst_41 = arith.constant dense<0.000000e+00> : vector<8x20xf32>
    %77 = tpu.matmul %75, %76, %cst_41 {dimension_numbers = #tpu.dot_dimension_numbers<[1], [0], [0], [1], [0, 0, 1, 1], [], []>} : vector<8x256xbf16>, vector<256x20xbf16>, vector<8x20xf32> -> vector<8x20xf32>
    %c0_42 = arith.constant 0 : index
    %c0_43 = arith.constant 0 : index
    %78 = vector.load %arg12[%c0_42, %c0_43] : memref<1x20xf32, #tpu.memory_space<vmem>>, vector<1x20xf32>
    %79 = vector.broadcast %78 : vector<1x20xf32> to vector<8x20xf32>
    %80 = arith.addf %77, %79 : vector<8x20xf32>
    %c0_44 = arith.constant 0 : index
    %c0_45 = arith.constant 0 : index
    %81 = vector.load %arg14[%c0_44, %c0_45] : memref<1x20xf32, #tpu.memory_space<vmem>>, vector<1x20xf32>
    %cst_46 = arith.constant 5.000000e-01 : f32
    %82 = vector.broadcast %cst_46 : f32 to vector<1x20xf32>
    %83 = arith.cmpf ogt, %81, %82 : vector<1x20xf32>
    %cst_47 = arith.constant -1.000000e+30 : f32
    %84 = vector.shape_cast %83 : vector<1x20xi1> to vector<1x20xi1>
    %85 = vector.broadcast %84 : vector<1x20xi1> to vector<8x20xi1>
    %86 = vector.broadcast %cst_47 : f32 to vector<8x20xf32>
    %87 = arith.select %85, %80, %86 : vector<8x20xi1>, vector<8x20xf32>
    %cst_48 = arith.constant dense<0xFF800000> : vector<8xf32>
    %88 = vector.multi_reduction <maximumf>, %87, %cst_48 [1] : vector<8x20xf32> to vector<8xf32>
    %89 = vector.shape_cast %88 : vector<8xf32> to vector<8x1xf32>
    %90 = vector.broadcast %89 : vector<8x1xf32> to vector<8x20xf32>
    %91 = arith.subf %80, %90 : vector<8x20xf32>
    %92 = math.exp %91 : vector<8x20xf32>
    %c0_49 = arith.constant 0 : index
    %c0_50 = arith.constant 0 : index
    %93 = vector.load %arg13[%c0_49, %c0_50] : memref<20x20xf32, #tpu.memory_space<vmem>>, vector<20x20xf32>
    %cst_51 = arith.constant dense<0.000000e+00> : vector<8x20xf32>
    %94 = tpu.matmul %92, %93, %cst_51 {dimension_numbers = #tpu.dot_dimension_numbers<[1], [0], [0], [1], [0, 0, 1, 1], [], []>, precision = #tpu.contract_precision<fp32>} : vector<8x20xf32>, vector<20x20xf32>, vector<8x20xf32> -> vector<8x20xf32>
    %95 = arith.divf %92, %94 : vector<8x20xf32>
    %96 = arith.negf %80 : vector<8x20xf32>
    %97 = math.exp %96 : vector<8x20xf32>
    %cst_52 = arith.constant 1.000000e+00 : f32
    %98 = vector.broadcast %cst_52 : f32 to vector<8x20xf32>
    %99 = arith.addf %98, %97 : vector<8x20xf32>
    %100 = arith.divf %98, %99 : vector<8x20xf32>
    %101 = vector.shape_cast %83 : vector<1x20xi1> to vector<1x20xi1>
    %102 = vector.broadcast %101 : vector<1x20xi1> to vector<8x20xi1>
    %103 = arith.select %102, %95, %100 : vector<8x20xi1>, vector<8x20xf32>
    %c0_53 = arith.constant 0 : index
    %c0_54 = arith.constant 0 : index
    %104 = vector.load %arg15[%c0_53, %c0_54] : memref<8x20xf32, #tpu.memory_space<vmem>>, vector<8x20xf32>
    tpu.vector_store %arg15[%c0_53, %c0_54], %103 {strides = array<i32>} : memref<8x20xf32, #tpu.memory_space<vmem>>, vector<8x20xf32>,
    return
  }
}

</mosaic_0001>

<llo_original>
// kernel: tpu_custom_call.1
$region0: #{tpu_custom_call.1}
  #allocation0 [shape = 'u32[]', space=smem, size = 0x4, offset = 0x4, fixed_abs, tag = 'smem constant byte address 0x4 - core index']
  #allocation1 [shape = 'u32[144,128]{1,0:T(1,128)}', space=vmem, size = 0x12000, scoped, tag = 'internal scratch']
  %s0 = inlined_call_operand.vmem [shape: f32[8,4,256], index: 0, kind: input, shape index: {}]
  %s1 = inlined_call_operand.vmem [shape: f32[4,512], index: 1, kind: input, shape index: {}]
  %s2 = inlined_call_operand.vmem [shape: f32[1,512], index: 2, kind: input, shape index: {}]
  %s3 = inlined_call_operand.hbm [shape: bf16[512,256], index: 3, kind: input, shape index: {}]
  %s4 = inlined_call_operand.vmem [shape: f32[1,256], index: 4, kind: input, shape index: {}]
  %s5 = inlined_call_operand.vmem [shape: f32[1,256], index: 5, kind: input, shape index: {}]
  %s6 = inlined_call_operand.vmem [shape: f32[1,256], index: 6, kind: input, shape index: {}]
  %s7 = inlined_call_operand.hbm [shape: bf16[256,256], index: 7, kind: input, shape index: {}]
  %s8 = inlined_call_operand.vmem [shape: f32[1,256], index: 8, kind: input, shape index: {}]
  %s9 = inlined_call_operand.vmem [shape: f32[1,256], index: 9, kind: input, shape index: {}]
  %s10 = inlined_call_operand.vmem [shape: f32[1,256], index: 10, kind: input, shape index: {}]
  %s11 = inlined_call_operand.vmem [shape: bf16[256,20], index: 11, kind: input, shape index: {}]
  %s12 = inlined_call_operand.vmem [shape: f32[1,20], index: 12, kind: input, shape index: {}]
  %s13 = inlined_call_operand.vmem [shape: f32[20,20], index: 13, kind: input, shape index: {}]
  %s14 = inlined_call_operand.vmem [shape: f32[1,20], index: 14, kind: input, shape index: {}]
  %s15 = inlined_call_operand.hbm [shape: f32[8,20], index: 15, kind: output, shape index: {}]
  %s16 = sld [smem:[#allocation0]]
  $region78: #{tpu_custom_call.1} parent=0
    _
  %s18 = ssub.s32 1, %s16
  %s19 = scalar_select 0, %s18, %s16
  $region1: #{tpu_custom_call.1} parent=0
    #allocation2 [shape = 'u8[262144]{0}', space=vmem, size = 0x40000, scoped, tag = 'input window, operand 3, single buffered']
    #allocation3 [shape = 's32[1]{0}', space=sflag, size = 0x4, scoped, tag = 'scoped memory for tpu_custom_call.1']
    #allocation4 [shape = 's32[1]{0}', space=sflag, size = 0x4, scoped, tag = 'scoped memory for tpu_custom_call.1']
    #allocation5 [shape = 'u8[131072]{0}', space=vmem, size = 0x20000, scoped, tag = 'input window, operand 7, single buffered']
    #allocation6 [shape = 's32[1]{0}', space=sflag, size = 0x4, scoped, tag = 'scoped memory for tpu_custom_call.1']
    #allocation7 [shape = 'u8[4096]{0}', space=vmem, size = 0x1000, scoped, tag = 'output window, operand 0, single buffered']
    %20 = vsyncpa [#allocation3], 0
    %21 = vsyncpa [#allocation6], 0
    %22 = vsyncpa [#allocation4], 0
    // Predicated region
    $region2: #{tpu_custom_call.1} parent=1 // pred_check
      _
    $region3: #{tpu_custom_call.1} parent=1 // pred_check_branch
      %24 = sbr.rel (0) target = $region5
    $region4: #{tpu_custom_call.1} parent=1 // pred_region
      _
    $region5: #{tpu_custom_call.1} parent=1 // pred_fallthru
      _
    // Predicated region
    $region6: #{tpu_custom_call.1} parent=1 // pred_check
      _
    $region7: #{tpu_custom_call.1} parent=1 // pred_check_branch
      %26 = sbr.rel (0) target = $region9
    $region8: #{tpu_custom_call.1} parent=1 // pred_region
      _
    $region9: #{tpu_custom_call.1} parent=1 // pred_fallthru
      _
    // Predicated region
    $region10: #{tpu_custom_call.1} parent=1 // pred_check
      _
    $region11: #{tpu_custom_call.1} parent=1 // pred_check_branch
      %28 = sbr.rel (0) target = $region13
    $region12: #{tpu_custom_call.1} parent=1 // pred_region
      _
    $region13: #{tpu_custom_call.1} parent=1 // pred_fallthru
      _
    // Predicated region
    $region14: #{tpu_custom_call.1} parent=1 // pred_check
      _
    $region15: #{tpu_custom_call.1} parent=1 // pred_check_branch
      %30 = sbr.rel (0) target = $region17
    $region16: #{tpu_custom_call.1} parent=1 // pred_region
      %s32 = ssub.s32 8192, 8192
      %33 = vsyncadd [#allocation3], %s32
      %s34 = sshll.u32 [#allocation2], 4
      %s35 = int_to_ptr.vmem [resolvable:$true] %s34
      %40 = dma.hbm_to_vmem [thread:$0]  %s3, 8192, %s35, [#allocation3], 128, 128, 8
    $region17: #{tpu_custom_call.1} parent=1 // pred_fallthru
      _
    // Predicated region
    $region18: #{tpu_custom_call.1} parent=1 // pred_check
      _
    $region19: #{tpu_custom_call.1} parent=1 // pred_check_branch
      %42 = sbr.rel (0) target = $region21
    $region20: #{tpu_custom_call.1} parent=1 // pred_region
      _
    $region21: #{tpu_custom_call.1} parent=1 // pred_fallthru
      _
    // Predicated region
    $region22: #{tpu_custom_call.1} parent=1 // pred_check
      _
    $region23: #{tpu_custom_call.1} parent=1 // pred_check_branch
      %44 = sbr.rel (0) target = $region25
    $region24: #{tpu_custom_call.1} parent=1 // pred_region
      _
    $region25: #{tpu_custom_call.1} parent=1 // pred_fallthru
      _
    // Predicated region
    $region26: #{tpu_custom_call.1} parent=1 // pred_check
      _
    $region27: #{tpu_custom_call.1} parent=1 // pred_check_branch
      %46 = sbr.rel (0) target = $region29
    $region28: #{tpu_custom_call.1} parent=1 // pred_region
      _
    $region29: #{tpu_custom_call.1} parent=1 // pred_fallthru
      _
    // Predicated region
    $region30: #{tpu_custom_call.1} parent=1 // pred_check
      _
    $region31: #{tpu_custom_call.1} parent=1 // pred_check_branch
      %48 = sbr.rel (0) target = $region33
    $region32: #{tpu_custom_call.1} parent=1 // pred_region
      %s50 = ssub.s32 4096, 4096
      %51 = vsyncadd [#allocation6], %s50
      %s52 = sshll.u32 [#allocation5], 4
      %s53 = int_to_ptr.vmem [resolvable:$true] %s52
      %58 = dma.hbm_to_vmem [thread:$0]  %s7, 4096, %s53, [#allocation6], 128, 128, 8
    $region33: #{tpu_custom_call.1} parent=1 // pred_fallthru
      _
    // Predicated region
    $region34: #{tpu_custom_call.1} parent=1 // pred_check
      _
    $region35: #{tpu_custom_call.1} parent=1 // pred_check_branch
      %60 = sbr.rel (0) target = $region37
    $region36: #{tpu_custom_call.1} parent=1 // pred_region
      _
    $region37: #{tpu_custom_call.1} parent=1 // pred_fallthru
      _
    // Predicated region
    $region38: #{tpu_custom_call.1} parent=1 // pred_check
      _
    $region39: #{tpu_custom_call.1} parent=1 // pred_check_branch
      %62 = sbr.rel (0) target = $region41
    $region40: #{tpu_custom_call.1} parent=1 // pred_region
      _
    $region41: #{tpu_custom_call.1} parent=1 // pred_fallthru
      _
    // Predicated region
    $region42: #{tpu_custom_call.1} parent=1 // pred_check
      _
    $region43: #{tpu_custom_call.1} parent=1 // pred_check_branch
      %64 = sbr.rel (0) target = $region45
    $region44: #{tpu_custom_call.1} parent=1 // pred_region
      _
    $region45: #{tpu_custom_call.1} parent=1 // pred_fallthru
      _
    // Predicated region
    $region46: #{tpu_custom_call.1} parent=1 // pred_check
      _
    $region47: #{tpu_custom_call.1} parent=1 // pred_check_branch
      %66 = sbr.rel (0) target = $region49
    $region48: #{tpu_custom_call.1} parent=1 // pred_region
      _
    $region49: #{tpu_custom_call.1} parent=1 // pred_fallthru
      _
    // Predicated region
    $region50: #{tpu_custom_call.1} parent=1 // pred_check
      _
    $region51: #{tpu_custom_call.1} parent=1 // pred_check_branch
      %68 = sbr.rel (0) target = $region53
    $region52: #{tpu_custom_call.1} parent=1 // pred_region
      _
    $region53: #{tpu_custom_call.1} parent=1 // pred_fallthru
      _
    // Predicated region
    $region54: #{tpu_custom_call.1} parent=1 // pred_check
      _
    $region55: #{tpu_custom_call.1} parent=1 // pred_check_branch
      %70 = sbr.rel (0) target = $region57
    $region56: #{tpu_custom_call.1} parent=1 // pred_region
      _
    $region57: #{tpu_custom_call.1} parent=1 // pred_fallthru
      _
    // Predicated region
    $region58: #{tpu_custom_call.1} parent=1 // pred_check
      _
    $region59: #{tpu_custom_call.1} parent=1 // pred_check_branch
      %72 = sbr.rel (0) target = $region61
    $region60: #{tpu_custom_call.1} parent=1 // pred_region
      _
    $region61: #{tpu_custom_call.1} parent=1 // pred_fallthru
      _
    // Predicated region
    $region62: #{tpu_custom_call.1} parent=1 // pred_check
      _
    $region63: #{tpu_custom_call.1} parent=1 // pred_check_branch
      %74 = sbr.rel (0) target = $region65
    $region64: #{tpu_custom_call.1} parent=1 // pred_region
      %75 = dma.done [#allocation3], 8192
    $region65: #{tpu_custom_call.1} parent=1 // pred_fallthru
      _
    // Predicated region
    $region66: #{tpu_custom_call.1} parent=1 // pred_check
      _
    $region67: #{tpu_custom_call.1} parent=1 // pred_check_branch
      %77 = sbr.rel (0) target = $region69
    $region68: #{tpu_custom_call.1} parent=1 // pred_region
      %78 = dma.done [#allocation6], 4096
    $region69: #{tpu_custom_call.1} parent=1 // pred_fallthru
      _
    %v80 = vld [vmem:[%s0] sm:$0xff]
    %v81 = vld [vmem:[%s0 + $0x8] sm:$0xff]
    %v82 = vld [vmem:[%s0 + $0x10] sm:$0xff]
    %v83 = vld [vmem:[%s0 + $0x18] sm:$0xff]
    %v84 = vld [vmem:[%s0 + $0x20] sm:$0xff]
    %v85 = vld [vmem:[%s0 + $0x28] sm:$0xff]
    %v86 = vld [vmem:[%s0 + $0x30] sm:$0xff]
    %v87 = vld [vmem:[%s0 + $0x38] sm:$0xff]
    %v96 = vcombine.high %v80, %v80
    %v97 = vcombine.high %v81, %v81
    %v98 = vcombine.high %v82, %v82
    %v99 = vcombine.high %v83, %v83
    %v100 = vcombine.high %v84, %v84
    %v101 = vcombine.high %v85, %v85
    %v102 = vcombine.high %v86, %v86
    %v103 = vcombine.high %v87, %v87
    %vm112 = vcmask 1043456
    %v113 = vsel %vm112, %v80, 0.0
    %v114 = vsel %vm112, %v96, 0.0
    %v115 = vadd.f32 %v113, %v114
    %116 = vadd.xlane.f32.xlu0 %v115
    %v117 = vpop.xlane.xlu0 %116
    %v118 = vsel %vm112, %v81, 0.0
    %v119 = vsel %vm112, %v97, 0.0
    %v120 = vadd.f32 %v118, %v119
    %121 = vadd.xlane.f32.xlu0 %v120
    %v122 = vpop.xlane.xlu0 %121
    %v123 = vsel %vm112, %v82, 0.0
    %v124 = vsel %vm112, %v98, 0.0
    %v125 = vadd.f32 %v123, %v124
    %126 = vadd.xlane.f32.xlu0 %v125
    %v127 = vpop.xlane.xlu0 %126
    %v128 = vsel %vm112, %v83, 0.0
    %v129 = vsel %vm112, %v99, 0.0
    %v130 = vadd.f32 %v128, %v129
    %131 = vadd.xlane.f32.xlu0 %v130
    %v132 = vpop.xlane.xlu0 %131
    %v133 = vsel %vm112, %v84, 0.0
    %v134 = vsel %vm112, %v100, 0.0
    %v135 = vadd.f32 %v133, %v134
    %136 = vadd.xlane.f32.xlu0 %v135
    %v137 = vpop.xlane.xlu0 %136
    %v138 = vsel %vm112, %v85, 0.0
    %v139 = vsel %vm112, %v101, 0.0
    %v140 = vadd.f32 %v138, %v139
    %141 = vadd.xlane.f32.xlu0 %v140
    %v142 = vpop.xlane.xlu0 %141
    %v143 = vsel %vm112, %v86, 0.0
    %v144 = vsel %vm112, %v102, 0.0
    %v145 = vadd.f32 %v143, %v144
    %146 = vadd.xlane.f32.xlu0 %v145
    %v147 = vpop.xlane.xlu0 %146
    %v148 = vsel %vm112, %v87, 0.0
    %v149 = vsel %vm112, %v103, 0.0
    %v150 = vadd.f32 %v148, %v149
    %151 = vadd.xlane.f32.xlu0 %v150
    %v152 = vpop.xlane.xlu0 %151
    %v153 = vrcp.pop 256.0
    %v154 = vmul.f32 %v117, %v153
    %v155 = vmul.f32 %v122, %v153
    %v156 = vmul.f32 %v127, %v153
    %v157 = vmul.f32 %v132, %v153
    %v158 = vmul.f32 %v137, %v153
    %v159 = vmul.f32 %v142, %v153
    %v160 = vmul.f32 %v147, %v153
    %v161 = vmul.f32 %v152, %v153
    %v162 = vld [vmem:[%s1] sm:$0xff]
    %v163 = vld [vmem:[%s1 + $0x8] sm:$0xff]
    %v164 = vld [vmem:[%s2] sm:$0xf]
    %v166 = vlaneseq
    %v167 = vshrl.u32 %v166, 7
    %v168 = vsub.s32 0, %v167
    %v169 = vrot.slane %v164, %v168
    %v170 = vlaneseq
    %v171 = vshrl.u32 %v170, 7
    %v172 = vsub.s32 1, %v171
    %v173 = vrot.slane %v164, %v172
    %v174 = vlaneseq
    %v175 = vshrl.u32 %v174, 7
    %v176 = vsub.s32 2, %v175
    %v177 = vrot.slane %v164, %v176
    %v178 = vlaneseq
    %v179 = vshrl.u32 %v178, 7
    %v180 = vsub.s32 3, %v179
    %v181 = vrot.slane %v164, %v180
    %v194 = vlaneseq
    %v195 = vand.u32 %v194, 127
    %v196 = vlaneseq
    %v197 = vshrl.u32 %v196, 7
    %v198 = vsub.s32 %v195, %v197
    %v199 = vrot.slane %v154, %v198
    %v200 = vlaneseq
    %v201 = vshrl.u32 %v200, 7
    %v202 = vsub.s32 %v195, %v201
    %v203 = vrot.slane %v155, %v202
    %v204 = vlaneseq
    %v205 = vshrl.u32 %v204, 7
    %v206 = vsub.s32 %v195, %v205
    %v207 = vrot.slane %v156, %v206
    %v208 = vlaneseq
    %v209 = vshrl.u32 %v208, 7
    %v210 = vsub.s32 %v195, %v209
    %v211 = vrot.slane %v157, %v210
    %v212 = vlaneseq
    %v213 = vshrl.u32 %v212, 7
    %v214 = vsub.s32 %v195, %v213
    %v215 = vrot.slane %v158, %v214
    %v216 = vlaneseq
    %v217 = vshrl.u32 %v216, 7
    %v218 = vsub.s32 %v195, %v217
    %v219 = vrot.slane %v159, %v218
    %v220 = vlaneseq
    %v221 = vshrl.u32 %v220, 7
    %v222 = vsub.s32 %v195, %v221
    %v223 = vrot.slane %v160, %v222
    %v224 = vlaneseq
    %v225 = vshrl.u32 %v224, 7
    %v226 = vsub.s32 %v195, %v225
    %v227 = vrot.slane %v161, %v226
    %vm228 = vcmask 1041409
    %v229 = vsel %vm228, %v203, %v199
    %vm230 = vcmask 1042434
    %v231 = vsel %vm230, %v207, %v229
    %vm232 = vcmask 1043459
    %v233 = vsel %vm232, %v211, %v231
    %vm234 = vcmask 1044484
    %v235 = vsel %vm234, %v215, %v233
    %vm236 = vcmask 1045509
    %v237 = vsel %vm236, %v219, %v235
    %vm238 = vcmask 1046534
    %v239 = vsel %vm238, %v223, %v237
    %vm240 = vcmask 1047559
    %v241 = vsel %vm240, %v227, %v239
    %v244 = vcombine.high %v162, %v162
    %v245 = vcombine.high %v163, %v163
    %vm246 = vcmask 31744
    %v247 = vsel %vm246, %v241, 0
    %v249 = vsel %vm112, %v162, 0
    %v251 = vsel %vm112, %v244, 0
    %v253 = vsel %vm112, %v163, 0
    %v255 = vsel %vm112, %v245, 0
    %257 = vmatprep.subr.mxu0 %v251
    %258 = vmatpush1.msra.mxu0 %v249
    %259 = vmatprep.subr.mxu0 0.0
    %260 = vmatpush1.msra.mxu0 0.0
    %261 = vmatprep.subr.mxu0 0.0
    %262 = vmatpush1.msra.mxu0 0.0
    %263 = vmatprep.subr.mxu0 0.0
    %264 = vmatpush1.msra.mxu0 0.0
    %265 = vmatprep.subr.mxu0 0.0
    %266 = vmatpush1.msra.mxu0 0.0
    %267 = vmatprep.subr.mxu0 0.0
    %268 = vmatpush1.msra.mxu0 0.0
    %269 = vmatprep.subr.mxu0 0.0
    %270 = vmatpush1.msra.mxu0 0.0
    %271 = vmatprep.subr.mxu0 0.0
    %272 = vmatpush1.msra.mxu0 0.0
    %273 = vmatprep.subr.mxu0 0.0
    %274 = vmatpush1.msra.mxu0 0.0
    %275 = vmatprep.subr.mxu0 0.0
    %276 = vmatpush1.msra.mxu0 0.0
    %277 = vmatprep.subr.mxu0 0.0
    %278 = vmatpush1.msra.mxu0 0.0
    %279 = vmatprep.subr.mxu0 0.0
    %280 = vmatpush1.msra.mxu0 0.0
    %281 = vmatprep.subr.mxu0 0.0
    %282 = vmatpush1.msra.mxu0 0.0
    %283 = vmatprep.subr.mxu0 0.0
    %284 = vmatpush1.msra.mxu0 0.0
    %285 = vmatprep.subr.mxu0 0.0
    %286 = vmatpush1.msra.mxu0 0.0
    %287 = vmatprep.subr.mxu0 0.0
    %288 = vmatpush1.msra.mxu0 0.0
    %289 = vmatprep.subr.mxu0 0.0
    %290 = vmatpush1.msra.mxu0 0.0
    %291 = vmatprep.subr.mxu0 0.0
    %292 = vmatpush1.msra.mxu0 0.0
    %293 = vmatprep.subr.mxu0 0.0
    %294 = vmatpush1.msra.mxu0 0.0
    %295 = vmatprep.subr.mxu0 0.0
    %296 = vmatpush1.msra.mxu0 0.0
    %297 = vmatprep.subr.mxu0 0.0
    %298 = vmatpush1.msra.mxu0 0.0
    %299 = vmatprep.subr.mxu0 0.0
    %300 = vmatpush1.msra.mxu0 0.0
    %301 = vmatprep.subr.mxu0 0.0
    %302 = vmatpush1.msra.mxu0 0.0
    %303 = vmatprep.subr.mxu0 0.0
    %304 = vmatpush1.msra.mxu0 0.0
    %305 = vmatprep.subr.mxu0 0.0
    %306 = vmatpush1.msra.mxu0 0.0
    %307 = vmatprep.subr.mxu0 0.0
    %308 = vmatpush1.msra.mxu0 0.0
    %309 = vmatprep.subr.mxu0 0.0
    %310 = vmatpush1.msra.mxu0 0.0
    %311 = vmatprep.subr.mxu0 0.0
    %312 = vmatpush1.msra.mxu0 0.0
    %313 = vmatprep.subr.mxu0 0.0
    %314 = vmatpush1.msra.mxu0 0.0
    %315 = vmatprep.subr.mxu0 0.0
    %316 = vmatpush1.msra.mxu0 0.0
    %317 = vmatprep.subr.mxu0 0.0
    %318 = vmatpush1.msra.mxu0 0.0
    %319 = vmatprep.subr.mxu0 0.0
    %320 = vmatpush1.msra.mxu0 0.0
    %321 = vmatprep.mubr.f32.mxu0 0.0
    %322 = vmatmul.mubr.f32.gmra.mrb[0].mxu0 %v247
    %v323 = vpop.f32.mrb[0].mxu0
    %v324 = vadd.f32 %v169, %v323
    %v325 = vpop.f32.mrb[0].mxu0
    %v326 = vadd.f32 %v173, %v325
    %327 = vdwg.mxu0
    %328 = vmatprep.subr.mxu0 %v255
    %329 = vmatpush1.msra.mxu0 %v253
    %330 = vmatprep.subr.mxu0 0.0
    %331 = vmatpush1.msra.mxu0 0.0
    %332 = vmatprep.subr.mxu0 0.0
    %333 = vmatpush1.msra.mxu0 0.0
    %334 = vmatprep.subr.mxu0 0.0
    %335 = vmatpush1.msra.mxu0 0.0
    %336 = vmatprep.subr.mxu0 0.0
    %337 = vmatpush1.msra.mxu0 0.0
    %338 = vmatprep.subr.mxu0 0.0
    %339 = vmatpush1.msra.mxu0 0.0
    %340 = vmatprep.subr.mxu0 0.0
    %341 = vmatpush1.msra.mxu0 0.0
    %342 = vmatprep.subr.mxu0 0.0
    %343 = vmatpush1.msra.mxu0 0.0
    %344 = vmatprep.subr.mxu0 0.0
    %345 = vmatpush1.msra.mxu0 0.0
    %346 = vmatprep.subr.mxu0 0.0
    %347 = vmatpush1.msra.mxu0 0.0
    %348 = vmatprep.subr.mxu0 0.0
    %349 = vmatpush1.msra.mxu0 0.0
    %350 = vmatprep.subr.mxu0 0.0
    %351 = vmatpush1.msra.mxu0 0.0
    %352 = vmatprep.subr.mxu0 0.0
    %353 = vmatpush1.msra.mxu0 0.0
    %354 = vmatprep.subr.mxu0 0.0
    %355 = vmatpush1.msra.mxu0 0.0
    %356 = vmatprep.subr.mxu0 0.0
    %357 = vmatpush1.msra.mxu0 0.0
    %358 = vmatprep.subr.mxu0 0.0
    %359 = vmatpush1.msra.mxu0 0.0
    %360 = vmatprep.subr.mxu0 0.0
    %361 = vmatpush1.msra.mxu0 0.0
    %362 = vmatprep.subr.mxu0 0.0
    %363 = vmatpush1.msra.mxu0 0.0
    %364 = vmatprep.subr.mxu0 0.0
    %365 = vmatpush1.msra.mxu0 0.0
    %366 = vmatprep.subr.mxu0 0.0
    %367 = vmatpush1.msra.mxu0 0.0
    %368 = vmatprep.subr.mxu0 0.0
    %369 = vmatpush1.msra.mxu0 0.0
    %370 = vmatprep.subr.mxu0 0.0
    %371 = vmatpush1.msra.mxu0 0.0
    %372 = vmatprep.subr.mxu0 0.0
    %373 = vmatpush1.msra.mxu0 0.0
    %374 = vmatprep.subr.mxu0 0.0
    %375 = vmatpush1.msra.mxu0 0.0
    %376 = vmatprep.subr.mxu0 0.0
    %377 = vmatpush1.msra.mxu0 0.0
    %378 = vmatprep.subr.mxu0 0.0
    %379 = vmatpush1.msra.mxu0 0.0
    %380 = vmatprep.subr.mxu0 0.0
    %381 = vmatpush1.msra.mxu0 0.0
    %382 = vmatprep.subr.mxu0 0.0
    %383 = vmatpush1.msra.mxu0 0.0
    %384 = vmatprep.subr.mxu0 0.0
    %385 = vmatpush1.msra.mxu0 0.0
    %386 = vmatprep.subr.mxu0 0.0
    %387 = vmatpush1.msra.mxu0 0.0
    %388 = vmatprep.subr.mxu0 0.0
    %389 = vmatpush1.msra.mxu0 0.0
    %390 = vmatprep.subr.mxu0 0.0
    %391 = vmatpush1.msra.mxu0 0.0
    %392 = vmatprep.mubr.f32.mxu0 0.0
    %393 = vmatmul.mubr.f32.gmra.mrb[0].mxu0 %v247
    %v394 = vpop.f32.mrb[0].mxu0
    %v395 = vadd.f32 %v177, %v394
    %v396 = vpop.f32.mrb[0].mxu0
    %v397 = vadd.f32 %v181, %v396
    %398 = vdwg.mxu0
    %v399 = vmax.f32 %v324, 0.0
    %v400 = vmax.f32 %v326, 0.0
    %v401 = vmax.f32 %v395, 0.0
    %v402 = vmax.f32 %v397, 0.0
    %v403 = vpack.c.bf16 %v399, %v399
    %v404 = vpack.c.bf16 %v400, %v400
    %v405 = vpack.c.bf16 %v401, %v401
    %v406 = vpack.c.bf16 %v402, %v402
    %v407 = vld [vmem:[#allocation2] sm:$0xff]
    %v408 = vld [vmem:[#allocation2 + $0x8] sm:$0xff]
    %v409 = vld [vmem:[#allocation2 + $0x10] sm:$0xff]
    %v410 = vld [vmem:[#allocation2 + $0x18] sm:$0xff]
    %v411 = vld [vmem:[#allocation2 + $0x20] sm:$0xff]
    %v412 = vld [vmem:[#allocation2 + $0x28] sm:$0xff]
    %v413 = vld [vmem:[#allocation2 + $0x30] sm:$0xff]
    %v414 = vld [vmem:[#allocation2 + $0x38] sm:$0xff]
    %v415 = vld [vmem:[#allocation2 + $0x40] sm:$0xff]
    %v416 = vld [vmem:[#allocation2 + $0x48] sm:$0xff]
    %v417 = vld [vmem:[#allocation2 + $0x50] sm:$0xff]
    %v418 = vld [vmem:[#allocation2 + $0x58] sm:$0xff]
    %v419 = vld [vmem:[#allocation2 + $0x60] sm:$0xff]
    %v420 = vld [vmem:[#allocation2 + $0x68] sm:$0xff]
    %v421 = vld [vmem:[#allocation2 + $0x70] sm:$0xff]
    %v422 = vld [vmem:[#allocation2 + $0x78] sm:$0xff]
    %v423 = vld [vmem:[#allocation2 + $0x80] sm:$0xff]
    %v424 = vld [vmem:[#allocation2 + $0x88] sm:$0xff]
    %v425 = vld [vmem:[#allocation2 + $0x90] sm:$0xff]
    %v426 = vld [vmem:[#allocation2 + $0x98] sm:$0xff]
    %v427 = vld [vmem:[#allocation2 + $0xa0] sm:$0xff]
    %v428 = vld [vmem:[#allocation2 + $0xa8] sm:$0xff]
    %v429 = vld [vmem:[#allocation2 + $0xb0] sm:$0xff]
    %v430 = vld [vmem:[#allocation2 + $0xb8] sm:$0xff]
    %v431 = vld [vmem:[#allocation2 + $0xc0] sm:$0xff]
    %v432 = vld [vmem:[#allocation2 + $0xc8] sm:$0xff]
    %v433 = vld [vmem:[#allocation2 + $0xd0] sm:$0xff]
    %v434 = vld [vmem:[#allocation2 + $0xd8] sm:$0xff]
    %v435 = vld [vmem:[#allocation2 + $0xe0] sm:$0xff]
    %v436 = vld [vmem:[#allocation2 + $0xe8] sm:$0xff]
    %v437 = vld [vmem:[#allocation2 + $0xf0] sm:$0xff]
    %v438 = vld [vmem:[#allocation2 + $0xf8] sm:$0xff]
    %v439 = vld [vmem:[#allocation2 + $0x100] sm:$0xff]
    %v440 = vld [vmem:[#allocation2 + $0x108] sm:$0xff]
    %v441 = vld [vmem:[#allocation2 + $0x110] sm:$0xff]
    %v442 = vld [vmem:[#allocation2 + $0x118] sm:$0xff]
    %v443 = vld [vmem:[#allocation2 + $0x120] sm:$0xff]
    %v444 = vld [vmem:[#allocation2 + $0x128] sm:$0xff]
    %v445 = vld [vmem:[#allocation2 + $0x130] sm:$0xff]
    %v446 = vld [vmem:[#allocation2 + $0x138] sm:$0xff]
    %v447 = vld [vmem:[#allocation2 + $0x140] sm:$0xff]
    %v448 = vld [vmem:[#allocation2 + $0x148] sm:$0xff]
    %v449 = vld [vmem:[#allocation2 + $0x150] sm:$0xff]
    %v450 = vld [vmem:[#allocation2 + $0x158] sm:$0xff]
    %v451 = vld [vmem:[#allocation2 + $0x160] sm:$0xff]
    %v452 = vld [vmem:[#allocation2 + $0x168] sm:$0xff]
    %v453 = vld [vmem:[#allocation2 + $0x170] sm:$0xff]
    %v454 = vld [vmem:[#allocation2 + $0x178] sm:$0xff]
    %v455 = vld [vmem:[#allocation2 + $0x180] sm:$0xff]
    %v456 = vld [vmem:[#allocation2 + $0x188] sm:$0xff]
    %v457 = vld [vmem:[#allocation2 + $0x190] sm:$0xff]
    %v458 = vld [vmem:[#allocation2 + $0x198] sm:$0xff]
    %v459 = vld [vmem:[#allocation2 + $0x1a0] sm:$0xff]
    %v460 = vld [vmem:[#allocation2 + $0x1a8] sm:$0xff]
    %v461 = vld [vmem:[#allocation2 + $0x1b0] sm:$0xff]
    %v462 = vld [vmem:[#allocation2 + $0x1b8] sm:$0xff]
    %v463 = vld [vmem:[#allocation2 + $0x1c0] sm:$0xff]
    %v464 = vld [vmem:[#allocation2 + $0x1c8] sm:$0xff]
    %v465 = vld [vmem:[#allocation2 + $0x1d0] sm:$0xff]
    %v466 = vld [vmem:[#allocation2 + $0x1d8] sm:$0xff]
    %v467 = vld [vmem:[#allocation2 + $0x1e0] sm:$0xff]
    %v468 = vld [vmem:[#allocation2 + $0x1e8] sm:$0xff]
    %v469 = vld [vmem:[#allocation2 + $0x1f0] sm:$0xff]
    %v470 = vld [vmem:[#allocation2 + $0x1f8] sm:$0xff]
    %v471 = vld [vmem:[%s4] sm:$0x3]
    %v473 = vlaneseq
    %v474 = vshrl.u32 %v473, 7
    %v475 = vsub.s32 0, %v474
    %v476 = vrot.slane %v471, %v475
    %v477 = vlaneseq
    %v478 = vshrl.u32 %v477, 7
    %v479 = vsub.s32 1, %v478
    %v480 = vrot.slane %v471, %v479
    %v547 = vunpack.c.l.b16 %v407
    %v548 = vunpack.c.h.b16 %v407
    %v549 = vunpack.c.l.b16 %v408
    %v550 = vunpack.c.h.b16 %v408
    %v551 = vunpack.c.l.b16 %v409
    %v552 = vunpack.c.h.b16 %v409
    %v553 = vunpack.c.l.b16 %v410
    %v554 = vunpack.c.h.b16 %v410
    %v555 = vunpack.c.l.b16 %v411
    %v556 = vunpack.c.h.b16 %v411
    %v557 = vunpack.c.l.b16 %v412
    %v558 = vunpack.c.h.b16 %v412
    %v559 = vunpack.c.l.b16 %v413
    %v560 = vunpack.c.h.b16 %v413
    %v561 = vunpack.c.l.b16 %v414
    %v562 = vunpack.c.h.b16 %v414
    %v563 = vunpack.c.l.b16 %v415
    %v564 = vunpack.c.h.b16 %v415
    %v565 = vunpack.c.l.b16 %v416
    %v566 = vunpack.c.h.b16 %v416
    %v567 = vunpack.c.l.b16 %v417
    %v568 = vunpack.c.h.b16 %v417
    %v569 = vunpack.c.l.b16 %v418
    %v570 = vunpack.c.h.b16 %v418
    %v571 = vunpack.c.l.b16 %v419
    %v572 = vunpack.c.h.b16 %v419
    %v573 = vunpack.c.l.b16 %v420
    %v574 = vunpack.c.h.b16 %v420
    %v575 = vunpack.c.l.b16 %v421
    %v576 = vunpack.c.h.b16 %v421
    %v577 = vunpack.c.l.b16 %v422
    %v578 = vunpack.c.h.b16 %v422
    %v579 = vunpack.c.l.b16 %v423
    %v580 = vunpack.c.h.b16 %v423
    %v581 = vunpack.c.l.b16 %v424
    %v582 = vunpack.c.h.b16 %v424
    %v583 = vunpack.c.l.b16 %v425
    %v584 = vunpack.c.h.b16 %v425
    %v585 = vunpack.c.l.b16 %v426
    %v586 = vunpack.c.h.b16 %v426
    %v587 = vunpack.c.l.b16 %v427
    %v588 = vunpack.c.h.b16 %v427
    %v589 = vunpack.c.l.b16 %v428
    %v590 = vunpack.c.h.b16 %v428
    %v591 = vunpack.c.l.b16 %v429
    %v592 = vunpack.c.h.b16 %v429
    %v593 = vunpack.c.l.b16 %v430
    %v594 = vunpack.c.h.b16 %v430
    %v595 = vunpack.c.l.b16 %v431
    %v596 = vunpack.c.h.b16 %v431
    %v597 = vunpack.c.l.b16 %v432
    %v598 = vunpack.c.h.b16 %v432
    %v599 = vunpack.c.l.b16 %v433
    %v600 = vunpack.c.h.b16 %v433
    %v601 = vunpack.c.l.b16 %v434
    %v602 = vunpack.c.h.b16 %v434
    %v603 = vunpack.c.l.b16 %v435
    %v604 = vunpack.c.h.b16 %v435
    %v605 = vunpack.c.l.b16 %v436
    %v606 = vunpack.c.h.b16 %v436
    %v607 = vunpack.c.l.b16 %v437
    %v608 = vunpack.c.h.b16 %v437
    %v609 = vunpack.c.l.b16 %v438
    %v610 = vunpack.c.h.b16 %v438
    %v611 = vunpack.c.l.b16 %v439
    %v612 = vunpack.c.h.b16 %v439
    %v613 = vunpack.c.l.b16 %v440
    %v614 = vunpack.c.h.b16 %v440
    %v615 = vunpack.c.l.b16 %v441
    %v616 = vunpack.c.h.b16 %v441
    %v617 = vunpack.c.l.b16 %v442
    %v618 = vunpack.c.h.b16 %v442
    %v619 = vunpack.c.l.b16 %v443
    %v620 = vunpack.c.h.b16 %v443
    %v621 = vunpack.c.l.b16 %v444
    %v622 = vunpack.c.h.b16 %v444
    %v623 = vunpack.c.l.b16 %v445
    %v624 = vunpack.c.h.b16 %v445
    %v625 = vunpack.c.l.b16 %v446
    %v626 = vunpack.c.h.b16 %v446
    %v627 = vunpack.c.l.b16 %v447
    %v628 = vunpack.c.h.b16 %v447
    %v629 = vunpack.c.l.b16 %v448
    %v630 = vunpack.c.h.b16 %v448
    %v631 = vunpack.c.l.b16 %v449
    %v632 = vunpack.c.h.b16 %v449
    %v633 = vunpack.c.l.b16 %v450
    %v634 = vunpack.c.h.b16 %v450
    %v635 = vunpack.c.l.b16 %v451
    %v636 = vunpack.c.h.b16 %v451
    %v637 = vunpack.c.l.b16 %v452
    %v638 = vunpack.c.h.b16 %v452
    %v639 = vunpack.c.l.b16 %v453
    %v640 = vunpack.c.h.b16 %v453
    %v641 = vunpack.c.l.b16 %v454
    %v642 = vunpack.c.h.b16 %v454
    %v643 = vunpack.c.l.b16 %v455
    %v644 = vunpack.c.h.b16 %v455
    %v645 = vunpack.c.l.b16 %v456
    %v646 = vunpack.c.h.b16 %v456
    %v647 = vunpack.c.l.b16 %v457
    %v648 = vunpack.c.h.b16 %v457
    %v649 = vunpack.c.l.b16 %v458
    %v650 = vunpack.c.h.b16 %v458
    %v651 = vunpack.c.l.b16 %v459
    %v652 = vunpack.c.h.b16 %v459
    %v653 = vunpack.c.l.b16 %v460
    %v654 = vunpack.c.h.b16 %v460
    %v655 = vunpack.c.l.b16 %v461
    %v656 = vunpack.c.h.b16 %v461
    %v657 = vunpack.c.l.b16 %v462
    %v658 = vunpack.c.h.b16 %v462
    %v659 = vunpack.c.l.b16 %v463
    %v660 = vunpack.c.h.b16 %v463
    %v661 = vunpack.c.l.b16 %v464
    %v662 = vunpack.c.h.b16 %v464
    %v663 = vunpack.c.l.b16 %v465
    %v664 = vunpack.c.h.b16 %v465
    %v665 = vunpack.c.l.b16 %v466
    %v666 = vunpack.c.h.b16 %v466
    %v667 = vunpack.c.l.b16 %v467
    %v668 = vunpack.c.h.b16 %v467
    %v669 = vunpack.c.l.b16 %v468
    %v670 = vunpack.c.h.b16 %v468
    %v671 = vunpack.c.l.b16 %v469
    %v672 = vunpack.c.h.b16 %v469
    %v673 = vunpack.c.l.b16 %v470
    %v674 = vunpack.c.h.b16 %v470
    %v675 = vpack.c.b16 %v549, %v547
    %v676 = vpack.c.b16 %v550, %v548
    %v677 = vpack.c.b16 %v553, %v551
    %v678 = vpack.c.b16 %v554, %v552
    %v679 = vpack.c.b16 %v557, %v555
    %v680 = vpack.c.b16 %v558, %v556
    %v681 = vpack.c.b16 %v561, %v559
    %v682 = vpack.c.b16 %v562, %v560
    %v683 = vpack.c.b16 %v565, %v563
    %v684 = vpack.c.b16 %v566, %v564
    %v685 = vpack.c.b16 %v569, %v567
    %v686 = vpack.c.b16 %v570, %v568
    %v687 = vpack.c.b16 %v573, %v571
    %v688 = vpack.c.b16 %v574, %v572
    %v689 = vpack.c.b16 %v577, %v575
    %v690 = vpack.c.b16 %v578, %v576
    %v691 = vpack.c.b16 %v581, %v579
    %v692 = vpack.c.b16 %v582, %v580
    %v693 = vpack.c.b16 %v585, %v583
    %v694 = vpack.c.b16 %v586, %v584
    %v695 = vpack.c.b16 %v589, %v587
    %v696 = vpack.c.b16 %v590, %v588
    %v697 = vpack.c.b16 %v593, %v591
    %v698 = vpack.c.b16 %v594, %v592
    %v699 = vpack.c.b16 %v597, %v595
    %v700 = vpack.c.b16 %v598, %v596
    %v701 = vpack.c.b16 %v601, %v599
    %v702 = vpack.c.b16 %v602, %v600
    %v703 = vpack.c.b16 %v605, %v603
    %v704 = vpack.c.b16 %v606, %v604
    %v705 = vpack.c.b16 %v609, %v607
    %v706 = vpack.c.b16 %v610, %v608
    %v707 = vpack.c.b16 %v613, %v611
    %v708 = vpack.c.b16 %v614, %v612
    %v709 = vpack.c.b16 %v617, %v615
    %v710 = vpack.c.b16 %v618, %v616
    %v711 = vpack.c.b16 %v621, %v619
    %v712 = vpack.c.b16 %v622, %v620
    %v713 = vpack.c.b16 %v625, %v623
    %v714 = vpack.c.b16 %v626, %v624
    %v715 = vpack.c.b16 %v629, %v627
    %v716 = vpack.c.b16 %v630, %v628
    %v717 = vpack.c.b16 %v633, %v631
    %v718 = vpack.c.b16 %v634, %v632
    %v719 = vpack.c.b16 %v637, %v635
    %v720 = vpack.c.b16 %v638, %v636
    %v721 = vpack.c.b16 %v641, %v639
    %v722 = vpack.c.b16 %v642, %v640
    %v723 = vpack.c.b16 %v645, %v643
    %v724 = vpack.c.b16 %v646, %v644
    %v725 = vpack.c.b16 %v649, %v647
    %v726 = vpack.c.b16 %v650, %v648
    %v727 = vpack.c.b16 %v653, %v651
    %v728 = vpack.c.b16 %v654, %v652
    %v729 = vpack.c.b16 %v657, %v655
    %v730 = vpack.c.b16 %v658, %v656
    %v731 = vpack.c.b16 %v661, %v659
    %v732 = vpack.c.b16 %v662, %v660
    %v733 = vpack.c.b16 %v665, %v663
    %v734 = vpack.c.b16 %v666, %v664
    %v735 = vpack.c.b16 %v669, %v667
    %v736 = vpack.c.b16 %v670, %v668
    %v737 = vpack.c.b16 %v673, %v671
    %v738 = vpack.c.b16 %v674, %v672
    %803 = vmatprep.subr.bf16.mxu0 %v676
    %804 = vmatpush1.bf16.msra.mxu0 %v675
    %805 = vmatprep.subr.bf16.mxu0 %v678
    %806 = vmatpush1.bf16.msra.mxu0 %v677
    %807 = vmatprep.subr.bf16.mxu0 %v680
    %808 = vmatpush1.bf16.msra.mxu0 %v679
    %809 = vmatprep.subr.bf16.mxu0 %v682
    %810 = vmatpush1.bf16.msra.mxu0 %v681
    %811 = vmatprep.subr.bf16.mxu0 %v684
    %812 = vmatpush1.bf16.msra.mxu0 %v683
    %813 = vmatprep.subr.bf16.mxu0 %v686
    %814 = vmatpush1.bf16.msra.mxu0 %v685
    %815 = vmatprep.subr.bf16.mxu0 %v688
    %816 = vmatpush1.bf16.msra.mxu0 %v687
    %817 = vmatprep.subr.bf16.mxu0 %v690
    %818 = vmatpush1.bf16.msra.mxu0 %v689
    %819 = vmatprep.subr.bf16.mxu0 %v692
    %820 = vmatpush1.bf16.msra.mxu0 %v691
    %821 = vmatprep.subr.bf16.mxu0 %v694
    %822 = vmatpush1.bf16.msra.mxu0 %v693
    %823 = vmatprep.subr.bf16.mxu0 %v696
    %824 = vmatpush1.bf16.msra.mxu0 %v695
    %825 = vmatprep.subr.bf16.mxu0 %v698
    %826 = vmatpush1.bf16.msra.mxu0 %v697
    %827 = vmatprep.subr.bf16.mxu0 %v700
    %828 = vmatpush1.bf16.msra.mxu0 %v699
    %829 = vmatprep.subr.bf16.mxu0 %v702
    %830 = vmatpush1.bf16.msra.mxu0 %v701
    %831 = vmatprep.subr.bf16.mxu0 %v704
    %832 = vmatpush1.bf16.msra.mxu0 %v703
    %833 = vmatprep.subr.bf16.mxu0 %v706
    %834 = vmatpush1.bf16.msra.mxu0 %v705
    %835 = vmatprep.mubr.bf16.mxu0 %v404
    %836 = vmatmul.mubr.bf16.gmra.mrb[0].mxu0 %v403
    %v837 = vpop.f32.mrb[0].mxu0
    %v838 = vadd.f32 %v476, %v837
    %v839 = vpop.f32.mrb[0].mxu0
    %v840 = vadd.f32 %v480, %v839
    %v841 = vpop.f32.mrb[0].mxu0
    %v842 = vpop.f32.mrb[0].mxu0
    %843 = vdwg.mxu0
    %844 = vmatprep.subr.bf16.mxu0 %v708
    %845 = vmatpush1.bf16.msra.mxu0 %v707
    %846 = vmatprep.subr.bf16.mxu0 %v710
    %847 = vmatpush1.bf16.msra.mxu0 %v709
    %848 = vmatprep.subr.bf16.mxu0 %v712
    %849 = vmatpush1.bf16.msra.mxu0 %v711
    %850 = vmatprep.subr.bf16.mxu0 %v714
    %851 = vmatpush1.bf16.msra.mxu0 %v713
    %852 = vmatprep.subr.bf16.mxu0 %v716
    %853 = vmatpush1.bf16.msra.mxu0 %v715
    %854 = vmatprep.subr.bf16.mxu0 %v718
    %855 = vmatpush1.bf16.msra.mxu0 %v717
    %856 = vmatprep.subr.bf16.mxu0 %v720
    %857 = vmatpush1.bf16.msra.mxu0 %v719
    %858 = vmatprep.subr.bf16.mxu0 %v722
    %859 = vmatpush1.bf16.msra.mxu0 %v721
    %860 = vmatprep.subr.bf16.mxu0 %v724
    %861 = vmatpush1.bf16.msra.mxu0 %v723
    %862 = vmatprep.subr.bf16.mxu0 %v726
    %863 = vmatpush1.bf16.msra.mxu0 %v725
    %864 = vmatprep.subr.bf16.mxu0 %v728
    %865 = vmatpush1.bf16.msra.mxu0 %v727
    %866 = vmatprep.subr.bf16.mxu0 %v730
    %867 = vmatpush1.bf16.msra.mxu0 %v729
    %868 = vmatprep.subr.bf16.mxu0 %v732
    %869 = vmatpush1.bf16.msra.mxu0 %v731
    %870 = vmatprep.subr.bf16.mxu0 %v734
    %871 = vmatpush1.bf16.msra.mxu0 %v733
    %872 = vmatprep.subr.bf16.mxu0 %v736
    %873 = vmatpush1.bf16.msra.mxu0 %v735
    %874 = vmatprep.subr.bf16.mxu0 %v738
    %875 = vmatpush1.bf16.msra.mxu0 %v737
    %876 = vmatprep.mubr.bf16.mxu0 %v406
    %877 = vmatmul.mubr.bf16.gmra.mrb[0].mxu0 %v405
    %v878 = vpop.f32.mrb[0].mxu0
    %v879 = vadd.f32 %v838, %v878
    %v880 = vpop.f32.mrb[0].mxu0
    %v881 = vadd.f32 %v840, %v880
    %v882 = vpop.f32.mrb[0].mxu0
    %v883 = vpop.f32.mrb[0].mxu0
    %884 = vdwg.mxu0
    %v885 = vmax.f32 %v879, 0.0
    %v886 = vmax.f32 %v881, 0.0
    %v887 = vrot.slane %v885, 4
    %v888 = vadd.f32 %v885, %v887
    %v889 = vrot.slane %v888, 2
    %v890 = vadd.f32 %v888, %v889
    %v891 = vrot.slane %v890, 1
    %v892 = vadd.f32 %v890, %v891
    %v893 = vrot.slane %v886, 4
    %v894 = vadd.f32 %v886, %v893
    %v895 = vrot.slane %v894, 2
    %v896 = vadd.f32 %v894, %v895
    %v897 = vrot.slane %v896, 1
    %v898 = vadd.f32 %v896, %v897
    %v899 = vrcp.pop 8.0
    %v900 = vmul.f32 %v892, %v899
    %v901 = vmul.f32 %v898, %v899
    %v902 = vmul.f32 %v885, %v885
    %v903 = vmul.f32 %v886, %v886
    %v904 = vrot.slane %v902, 4
    %v905 = vadd.f32 %v902, %v904
    %v906 = vrot.slane %v905, 2
    %v907 = vadd.f32 %v905, %v906
    %v908 = vrot.slane %v907, 1
    %v909 = vadd.f32 %v907, %v908
    %v910 = vrot.slane %v903, 4
    %v911 = vadd.f32 %v903, %v910
    %v912 = vrot.slane %v911, 2
    %v913 = vadd.f32 %v911, %v912
    %v914 = vrot.slane %v913, 1
    %v915 = vadd.f32 %v913, %v914
    %v916 = vmul.f32 %v909, %v899
    %v917 = vmul.f32 %v915, %v899
    %v918 = vmul.f32 %v900, %v900
    %v919 = vmul.f32 %v901, %v901
    %v920 = vsub.f32 %v916, %v918
    %v921 = vsub.f32 %v917, %v919
    %v922 = vsub.f32 %v885, %v900
    %v923 = vsub.f32 %v886, %v901
    %v924 = vadd.f32 %v920, 0.2
    %v925 = vadd.f32 %v921, 0.2
    %v926 = vrsqrt.pop %v924
    %v927 = vrsqrt.pop %v925
    %v928 = vmul.f32 %v922, %v926
    %v929 = vmul.f32 %v923, %v927
    %v930 = vld [vmem:[%s5] sm:$0x3]
    %v932 = vlaneseq
    %v933 = vshrl.u32 %v932, 7
    %v934 = vsub.s32 0, %v933
    %v935 = vrot.slane %v930, %v934
    %v936 = vlaneseq
    %v937 = vshrl.u32 %v936, 7
    %v938 = vsub.s32 1, %v937
    %v939 = vrot.slane %v930, %v938
    %v942 = vmul.f32 %v928, %v935
    %v943 = vmul.f32 %v929, %v939
    %v944 = vld [vmem:[%s6] sm:$0x3]
    %v946 = vlaneseq
    %v947 = vshrl.u32 %v946, 7
    %v948 = vsub.s32 0, %v947
    %v949 = vrot.slane %v944, %v948
    %v950 = vlaneseq
    %v951 = vshrl.u32 %v950, 7
    %v952 = vsub.s32 1, %v951
    %v953 = vrot.slane %v944, %v952
    %v956 = vadd.f32 %v942, %v949
    %v957 = vadd.f32 %v943, %v953
    %v958 = vpack.c.bf16 %v956, %v956
    %v959 = vpack.c.bf16 %v957, %v957
    %v960 = vld [vmem:[#allocation5] sm:$0xff]
    %v961 = vld [vmem:[#allocation5 + $0x8] sm:$0xff]
    %v962 = vld [vmem:[#allocation5 + $0x10] sm:$0xff]
    %v963 = vld [vmem:[#allocation5 + $0x18] sm:$0xff]
    %v964 = vld [vmem:[#allocation5 + $0x20] sm:$0xff]
    %v965 = vld [vmem:[#allocation5 + $0x28] sm:$0xff]
    %v966 = vld [vmem:[#allocation5 + $0x30] sm:$0xff]
    %v967 = vld [vmem:[#allocation5 + $0x38] sm:$0xff]
    %v968 = vld [vmem:[#allocation5 + $0x40] sm:$0xff]
    %v969 = vld [vmem:[#allocation5 + $0x48] sm:$0xff]
    %v970 = vld [vmem:[#allocation5 + $0x50] sm:$0xff]
    %v971 = vld [vmem:[#allocation5 + $0x58] sm:$0xff]
    %v972 = vld [vmem:[#allocation5 + $0x60] sm:$0xff]
    %v973 = vld [vmem:[#allocation5 + $0x68] sm:$0xff]
    %v974 = vld [vmem:[#allocation5 + $0x70] sm:$0xff]
    %v975 = vld [vmem:[#allocation5 + $0x78] sm:$0xff]
    %v976 = vld [vmem:[#allocation5 + $0x80] sm:$0xff]
    %v977 = vld [vmem:[#allocation5 + $0x88] sm:$0xff]
    %v978 = vld [vmem:[#allocation5 + $0x90] sm:$0xff]
    %v979 = vld [vmem:[#allocation5 + $0x98] sm:$0xff]
    %v980 = vld [vmem:[#allocation5 + $0xa0] sm:$0xff]
    %v981 = vld [vmem:[#allocation5 + $0xa8] sm:$0xff]
    %v982 = vld [vmem:[#allocation5 + $0xb0] sm:$0xff]
    %v983 = vld [vmem:[#allocation5 + $0xb8] sm:$0xff]
    %v984 = vld [vmem:[#allocation5 + $0xc0] sm:$0xff]
    %v985 = vld [vmem:[#allocation5 + $0xc8] sm:$0xff]
    %v986 = vld [vmem:[#allocation5 + $0xd0] sm:$0xff]
    %v987 = vld [vmem:[#allocation5 + $0xd8] sm:$0xff]
    %v988 = vld [vmem:[#allocation5 + $0xe0] sm:$0xff]
    %v989 = vld [vmem:[#allocation5 + $0xe8] sm:$0xff]
    %v990 = vld [vmem:[#allocation5 + $0xf0] sm:$0xff]
    %v991 = vld [vmem:[#allocation5 + $0xf8] sm:$0xff]
    %v992 = vld [vmem:[%s8] sm:$0x3]
    %v994 = vlaneseq
    %v995 = vshrl.u32 %v994, 7
    %v996 = vsub.s32 0, %v995
    %v997 = vrot.slane %v992, %v996
    %v998 = vlaneseq
    %v999 = vshrl.u32 %v998, 7
    %v1000 = vsub.s32 1, %v999
    %v1001 = vrot.slane %v992, %v1000
    %v1036 = vunpack.c.l.b16 %v960
    %v1037 = vunpack.c.h.b16 %v960
    %v1038 = vunpack.c.l.b16 %v961
    %v1039 = vunpack.c.h.b16 %v961
    %v1040 = vunpack.c.l.b16 %v962
    %v1041 = vunpack.c.h.b16 %v962
    %v1042 = vunpack.c.l.b16 %v963
    %v1043 = vunpack.c.h.b16 %v963
    %v1044 = vunpack.c.l.b16 %v964
    %v1045 = vunpack.c.h.b16 %v964
    %v1046 = vunpack.c.l.b16 %v965
    %v1047 = vunpack.c.h.b16 %v965
    %v1048 = vunpack.c.l.b16 %v966
    %v1049 = vunpack.c.h.b16 %v966
    %v1050 = vunpack.c.l.b16 %v967
    %v1051 = vunpack.c.h.b16 %v967
    %v1052 = vunpack.c.l.b16 %v968
    %v1053 = vunpack.c.h.b16 %v968
    %v1054 = vunpack.c.l.b16 %v969
    %v1055 = vunpack.c.h.b16 %v969
    %v1056 = vunpack.c.l.b16 %v970
    %v1057 = vunpack.c.h.b16 %v970
    %v1058 = vunpack.c.l.b16 %v971
    %v1059 = vunpack.c.h.b16 %v971
    %v1060 = vunpack.c.l.b16 %v972
    %v1061 = vunpack.c.h.b16 %v972
    %v1062 = vunpack.c.l.b16 %v973
    %v1063 = vunpack.c.h.b16 %v973
    %v1064 = vunpack.c.l.b16 %v974
    %v1065 = vunpack.c.h.b16 %v974
    %v1066 = vunpack.c.l.b16 %v975
    %v1067 = vunpack.c.h.b16 %v975
    %v1068 = vunpack.c.l.b16 %v976
    %v1069 = vunpack.c.h.b16 %v976
    %v1070 = vunpack.c.l.b16 %v977
    %v1071 = vunpack.c.h.b16 %v977
    %v1072 = vunpack.c.l.b16 %v978
    %v1073 = vunpack.c.h.b16 %v978
    %v1074 = vunpack.c.l.b16 %v979
    %v1075 = vunpack.c.h.b16 %v979
    %v1076 = vunpack.c.l.b16 %v980
    %v1077 = vunpack.c.h.b16 %v980
    %v1078 = vunpack.c.l.b16 %v981
    %v1079 = vunpack.c.h.b16 %v981
    %v1080 = vunpack.c.l.b16 %v982
    %v1081 = vunpack.c.h.b16 %v982
    %v1082 = vunpack.c.l.b16 %v983
    %v1083 = vunpack.c.h.b16 %v983
    %v1084 = vunpack.c.l.b16 %v984
    %v1085 = vunpack.c.h.b16 %v984
    %v1086 = vunpack.c.l.b16 %v985
    %v1087 = vunpack.c.h.b16 %v985
    %v1088 = vunpack.c.l.b16 %v986
    %v1089 = vunpack.c.h.b16 %v986
    %v1090 = vunpack.c.l.b16 %v987
    %v1091 = vunpack.c.h.b16 %v987
    %v1092 = vunpack.c.l.b16 %v988
    %v1093 = vunpack.c.h.b16 %v988
    %v1094 = vunpack.c.l.b16 %v989
    %v1095 = vunpack.c.h.b16 %v989
    %v1096 = vunpack.c.l.b16 %v990
    %v1097 = vunpack.c.h.b16 %v990
    %v1098 = vunpack.c.l.b16 %v991
    %v1099 = vunpack.c.h.b16 %v991
    %v1100 = vpack.c.b16 %v1038, %v1036
    %v1101 = vpack.c.b16 %v1039, %v1037
    %v1102 = vpack.c.b16 %v1042, %v1040
    %v1103 = vpack.c.b16 %v1043, %v1041
    %v1104 = vpack.c.b16 %v1046, %v1044
    %v1105 = vpack.c.b16 %v1047, %v1045
    %v1106 = vpack.c.b16 %v1050, %v1048
    %v1107 = vpack.c.b16 %v1051, %v1049
    %v1108 = vpack.c.b16 %v1054, %v1052
    %v1109 = vpack.c.b16 %v1055, %v1053
    %v1110 = vpack.c.b16 %v1058, %v1056
    %v1111 = vpack.c.b16 %v1059, %v1057
    %v1112 = vpack.c.b16 %v1062, %v1060
    %v1113 = vpack.c.b16 %v1063, %v1061
    %v1114 = vpack.c.b16 %v1066, %v1064
    %v1115 = vpack.c.b16 %v1067, %v1065
    %v1116 = vpack.c.b16 %v1070, %v1068
    %v1117 = vpack.c.b16 %v1071, %v1069
    %v1118 = vpack.c.b16 %v1074, %v1072
    %v1119 = vpack.c.b16 %v1075, %v1073
    %v1120 = vpack.c.b16 %v1078, %v1076
    %v1121 = vpack.c.b16 %v1079, %v1077
    %v1122 = vpack.c.b16 %v1082, %v1080
    %v1123 = vpack.c.b16 %v1083, %v1081
    %v1124 = vpack.c.b16 %v1086, %v1084
    %v1125 = vpack.c.b16 %v1087, %v1085
    %v1126 = vpack.c.b16 %v1090, %v1088
    %v1127 = vpack.c.b16 %v1091, %v1089
    %v1128 = vpack.c.b16 %v1094, %v1092
    %v1129 = vpack.c.b16 %v1095, %v1093
    %v1130 = vpack.c.b16 %v1098, %v1096
    %v1131 = vpack.c.b16 %v1099, %v1097
    %1164 = vmatprep.subr.bf16.mxu0 %v1101
    %1165 = vmatpush1.bf16.msra.mxu0 %v1100
    %1166 = vmatprep.subr.bf16.mxu0 %v1103
    %1167 = vmatpush1.bf16.msra.mxu0 %v1102
    %1168 = vmatprep.subr.bf16.mxu0 %v1105
    %1169 = vmatpush1.bf16.msra.mxu0 %v1104
    %1170 = vmatprep.subr.bf16.mxu0 %v1107
    %1171 = vmatpush1.bf16.msra.mxu0 %v1106
    %1172 = vmatprep.subr.bf16.mxu0 %v1109
    %1173 = vmatpush1.bf16.msra.mxu0 %v1108
    %1174 = vmatprep.subr.bf16.mxu0 %v1111
    %1175 = vmatpush1.bf16.msra.mxu0 %v1110
    %1176 = vmatprep.subr.bf16.mxu0 %v1113
    %1177 = vmatpush1.bf16.msra.mxu0 %v1112
    %1178 = vmatprep.subr.bf16.mxu0 %v1115
    %1179 = vmatpush1.bf16.msra.mxu0 %v1114
    %1180 = vmatprep.subr.bf16.mxu0 %v1117
    %1181 = vmatpush1.bf16.msra.mxu0 %v1116
    %1182 = vmatprep.subr.bf16.mxu0 %v1119
    %1183 = vmatpush1.bf16.msra.mxu0 %v1118
    %1184 = vmatprep.subr.bf16.mxu0 %v1121
    %1185 = vmatpush1.bf16.msra.mxu0 %v1120
    %1186 = vmatprep.subr.bf16.mxu0 %v1123
    %1187 = vmatpush1.bf16.msra.mxu0 %v1122
    %1188 = vmatprep.subr.bf16.mxu0 %v1125
    %1189 = vmatpush1.bf16.msra.mxu0 %v1124
    %1190 = vmatprep.subr.bf16.mxu0 %v1127
    %1191 = vmatpush1.bf16.msra.mxu0 %v1126
    %1192 = vmatprep.subr.bf16.mxu0 %v1129
    %1193 = vmatpush1.bf16.msra.mxu0 %v1128
    %1194 = vmatprep.subr.bf16.mxu0 %v1131
    %1195 = vmatpush1.bf16.msra.mxu0 %v1130
    %1196 = vmatprep.mubr.bf16.mxu0 %v959
    %1197 = vmatmul.mubr.bf16.gmra.mrb[0].mxu0 %v958
    %v1198 = vpop.f32.mrb[0].mxu0
    %v1199 = vadd.f32 %v997, %v1198
    %v1200 = vpop.f32.mrb[0].mxu0
    %v1201 = vadd.f32 %v1001, %v1200
    %v1202 = vpop.f32.mrb[0].mxu0
    %v1203 = vpop.f32.mrb[0].mxu0
    %1204 = vdwg.mxu0
    %v1205 = vmax.f32 %v1199, 0.0
    %v1206 = vmax.f32 %v1201, 0.0
    %v1207 = vrot.slane %v1205, 4
    %v1208 = vadd.f32 %v1205, %v1207
    %v1209 = vrot.slane %v1208, 2
    %v1210 = vadd.f32 %v1208, %v1209
    %v1211 = vrot.slane %v1210, 1
    %v1212 = vadd.f32 %v1210, %v1211
    %v1213 = vrot.slane %v1206, 4
    %v1214 = vadd.f32 %v1206, %v1213
    %v1215 = vrot.slane %v1214, 2
    %v1216 = vadd.f32 %v1214, %v1215
    %v1217 = vrot.slane %v1216, 1
    %v1218 = vadd.f32 %v1216, %v1217
    %v1219 = vmul.f32 %v1212, %v899
    %v1220 = vmul.f32 %v1218, %v899
    %v1221 = vmul.f32 %v1205, %v1205
    %v1222 = vmul.f32 %v1206, %v1206
    %v1223 = vrot.slane %v1221, 4
    %v1224 = vadd.f32 %v1221, %v1223
    %v1225 = vrot.slane %v1224, 2
    %v1226 = vadd.f32 %v1224, %v1225
    %v1227 = vrot.slane %v1226, 1
    %v1228 = vadd.f32 %v1226, %v1227
    %v1229 = vrot.slane %v1222, 4
    %v1230 = vadd.f32 %v1222, %v1229
    %v1231 = vrot.slane %v1230, 2
    %v1232 = vadd.f32 %v1230, %v1231
    %v1233 = vrot.slane %v1232, 1
    %v1234 = vadd.f32 %v1232, %v1233
    %v1235 = vmul.f32 %v1228, %v899
    %v1236 = vmul.f32 %v1234, %v899
    %v1237 = vmul.f32 %v1219, %v1219
    %v1238 = vmul.f32 %v1220, %v1220
    %v1239 = vsub.f32 %v1235, %v1237
    %v1240 = vsub.f32 %v1236, %v1238
    %v1241 = vsub.f32 %v1205, %v1219
    %v1242 = vsub.f32 %v1206, %v1220
    %v1243 = vadd.f32 %v1239, 0.2
    %v1244 = vadd.f32 %v1240, 0.2
    %v1245 = vrsqrt.pop %v1243
    %v1246 = vrsqrt.pop %v1244
    %v1247 = vmul.f32 %v1241, %v1245
    %v1248 = vmul.f32 %v1242, %v1246
    %v1249 = vld [vmem:[%s9] sm:$0x3]
    %v1251 = vlaneseq
    %v1252 = vshrl.u32 %v1251, 7
    %v1253 = vsub.s32 0, %v1252
    %v1254 = vrot.slane %v1249, %v1253
    %v1255 = vlaneseq
    %v1256 = vshrl.u32 %v1255, 7
    %v1257 = vsub.s32 1, %v1256
    %v1258 = vrot.slane %v1249, %v1257
    %v1261 = vmul.f32 %v1247, %v1254
    %v1262 = vmul.f32 %v1248, %v1258
    %v1263 = vld [vmem:[%s10] sm:$0x3]
    %v1265 = vlaneseq
    %v1266 = vshrl.u32 %v1265, 7
    %v1267 = vsub.s32 0, %v1266
    %v1268 = vrot.slane %v1263, %v1267
    %v1269 = vlaneseq
    %v1270 = vshrl.u32 %v1269, 7
    %v1271 = vsub.s32 1, %v1270
    %v1272 = vrot.slane %v1263, %v1271
    %v1275 = vadd.f32 %v1261, %v1268
    %v1276 = vadd.f32 %v1262, %v1272
    %v1277 = vpack.c.bf16 %v1275, %v1275
    %v1278 = vpack.c.bf16 %v1276, %v1276
    %v1279 = vld [vmem:[%s11] sm:$0xf]
    %v1280 = vld [vmem:[%s11 + $0x4] sm:$0xf]
    %v1281 = vld [vmem:[%s11 + $0x8] sm:$0xf]
    %v1282 = vld [vmem:[%s11 + $0xc] sm:$0xf]
    %v1283 = vld [vmem:[%s11 + $0x10] sm:$0xf]
    %v1284 = vld [vmem:[%s11 + $0x14] sm:$0xf]
    %v1285 = vld [vmem:[%s11 + $0x18] sm:$0xf]
    %v1286 = vld [vmem:[%s11 + $0x1c] sm:$0xf]
    %v1287 = vld [vmem:[%s11 + $0x20] sm:$0xf]
    %v1288 = vld [vmem:[%s11 + $0x24] sm:$0xf]
    %v1289 = vld [vmem:[%s11 + $0x28] sm:$0xf]
    %v1290 = vld [vmem:[%s11 + $0x2c] sm:$0xf]
    %v1291 = vld [vmem:[%s11 + $0x30] sm:$0xf]
    %v1292 = vld [vmem:[%s11 + $0x34] sm:$0xf]
    %v1293 = vld [vmem:[%s11 + $0x38] sm:$0xf]
    %v1294 = vld [vmem:[%s11 + $0x3c] sm:$0xf]
    %v1295 = vld [vmem:[%s11 + $0x40] sm:$0xf]
    %v1296 = vld [vmem:[%s11 + $0x44] sm:$0xf]
    %v1297 = vld [vmem:[%s11 + $0x48] sm:$0xf]
    %v1298 = vld [vmem:[%s11 + $0x4c] sm:$0xf]
    %v1299 = vld [vmem:[%s11 + $0x50] sm:$0xf]
    %v1300 = vld [vmem:[%s11 + $0x54] sm:$0xf]
    %v1301 = vld [vmem:[%s11 + $0x58] sm:$0xf]
    %v1302 = vld [vmem:[%s11 + $0x5c] sm:$0xf]
    %v1303 = vld [vmem:[%s11 + $0x60] sm:$0xf]
    %v1304 = vld [vmem:[%s11 + $0x64] sm:$0xf]
    %v1305 = vld [vmem:[%s11 + $0x68] sm:$0xf]
    %v1306 = vld [vmem:[%s11 + $0x6c] sm:$0xf]
    %v1307 = vld [vmem:[%s11 + $0x70] sm:$0xf]
    %v1308 = vld [vmem:[%s11 + $0x74] sm:$0xf]
    %v1309 = vld [vmem:[%s11 + $0x78] sm:$0xf]
    %v1310 = vld [vmem:[%s11 + $0x7c] sm:$0xf]
    %v1311 = vld [vmem:[%s12] sm:$0x1]
    %v1313 = vlaneseq
    %v1314 = vshrl.u32 %v1313, 7
    %v1315 = vsub.s32 0, %v1314
    %v1316 = vrot.slane %v1311, %v1315
    %v1350 = vunpack.c.l.b16 %v1279
    %v1351 = vunpack.c.l.b16 %v1280
    %v1352 = vunpack.c.l.b16 %v1281
    %v1353 = vunpack.c.l.b16 %v1282
    %v1354 = vunpack.c.l.b16 %v1283
    %v1355 = vunpack.c.l.b16 %v1284
    %v1356 = vunpack.c.l.b16 %v1285
    %v1357 = vunpack.c.l.b16 %v1286
    %v1358 = vunpack.c.l.b16 %v1287
    %v1359 = vunpack.c.l.b16 %v1288
    %v1360 = vunpack.c.l.b16 %v1289
    %v1361 = vunpack.c.l.b16 %v1290
    %v1362 = vunpack.c.l.b16 %v1291
    %v1363 = vunpack.c.l.b16 %v1292
    %v1364 = vunpack.c.l.b16 %v1293
    %v1365 = vunpack.c.l.b16 %v1294
    %v1366 = vunpack.c.l.b16 %v1295
    %v1367 = vunpack.c.l.b16 %v1296
    %v1368 = vunpack.c.l.b16 %v1297
    %v1369 = vunpack.c.l.b16 %v1298
    %v1370 = vunpack.c.l.b16 %v1299
    %v1371 = vunpack.c.l.b16 %v1300
    %v1372 = vunpack.c.l.b16 %v1301
    %v1373 = vunpack.c.l.b16 %v1302
    %v1374 = vunpack.c.l.b16 %v1303
    %v1375 = vunpack.c.l.b16 %v1304
    %v1376 = vunpack.c.l.b16 %v1305
    %v1377 = vunpack.c.l.b16 %v1306
    %v1378 = vunpack.c.l.b16 %v1307
    %v1379 = vunpack.c.l.b16 %v1308
    %v1380 = vunpack.c.l.b16 %v1309
    %v1381 = vunpack.c.l.b16 %v1310
    %v1382 = vpack.c.b16 %v1351, %v1350
    %v1383 = vpack.c.b16 %v1353, %v1352
    %v1384 = vpack.c.b16 %v1355, %v1354
    %v1385 = vpack.c.b16 %v1357, %v1356
    %v1386 = vpack.c.b16 %v1359, %v1358
    %v1387 = vpack.c.b16 %v1361, %v1360
    %v1388 = vpack.c.b16 %v1363, %v1362
    %v1389 = vpack.c.b16 %v1365, %v1364
    %v1390 = vpack.c.b16 %v1367, %v1366
    %v1391 = vpack.c.b16 %v1369, %v1368
    %v1392 = vpack.c.b16 %v1371, %v1370
    %v1393 = vpack.c.b16 %v1373, %v1372
    %v1394 = vpack.c.b16 %v1375, %v1374
    %v1395 = vpack.c.b16 %v1377, %v1376
    %v1396 = vpack.c.b16 %v1379, %v1378
    %v1397 = vpack.c.b16 %v1381, %v1380
    %1414 = vmatprep.subr.bf16.mxu0 0
    %1415 = vmatpush1.bf16.msra.mxu0 %v1382
    %1416 = vmatprep.subr.bf16.mxu0 0
    %1417 = vmatpush1.bf16.msra.mxu0 %v1383
    %1418 = vmatprep.subr.bf16.mxu0 0
    %1419 = vmatpush1.bf16.msra.mxu0 %v1384
    %1420 = vmatprep.subr.bf16.mxu0 0
    %1421 = vmatpush1.bf16.msra.mxu0 %v1385
    %1422 = vmatprep.subr.bf16.mxu0 0
    %1423 = vmatpush1.bf16.msra.mxu0 %v1386
    %1424 = vmatprep.subr.bf16.mxu0 0
    %1425 = vmatpush1.bf16.msra.mxu0 %v1387
    %1426 = vmatprep.subr.bf16.mxu0 0
    %1427 = vmatpush1.bf16.msra.mxu0 %v1388
    %1428 = vmatprep.subr.bf16.mxu0 0
    %1429 = vmatpush1.bf16.msra.mxu0 %v1389
    %1430 = vmatprep.subr.bf16.mxu0 0
    %1431 = vmatpush1.bf16.msra.mxu0 %v1390
    %1432 = vmatprep.subr.bf16.mxu0 0
    %1433 = vmatpush1.bf16.msra.mxu0 %v1391
    %1434 = vmatprep.subr.bf16.mxu0 0
    %1435 = vmatpush1.bf16.msra.mxu0 %v1392
    %1436 = vmatprep.subr.bf16.mxu0 0
    %1437 = vmatpush1.bf16.msra.mxu0 %v1393
    %1438 = vmatprep.subr.bf16.mxu0 0
    %1439 = vmatpush1.bf16.msra.mxu0 %v1394
    %1440 = vmatprep.subr.bf16.mxu0 0
    %1441 = vmatpush1.bf16.msra.mxu0 %v1395
    %1442 = vmatprep.subr.bf16.mxu0 0
    %1443 = vmatpush1.bf16.msra.mxu0 %v1396
    %1444 = vmatprep.subr.bf16.mxu0 0
    %1445 = vmatpush1.bf16.msra.mxu0 %v1397
    %1446 = vmatprep.mubr.bf16.mxu0 %v1278
    %1447 = vmatmul.mubr.bf16.gmra.mrb[0].mxu0 %v1277
    %v1448 = vpop.f32.mrb[0].mxu0
    %v1449 = vadd.f32 %v1316, %v1448
    %v1450 = vpop.f32.mrb[0].mxu0
    %v1451 = vpop.f32.mrb[0].mxu0
    %v1452 = vpop.f32.mrb[0].mxu0
    %1453 = vdwg.mxu0
    %v1454 = vld [vmem:[%s14] sm:$0x1]
    %vm1455 = vcmp.gt.f32.partialorder %v1454, 0.5
    %v1456 = vsel %vm1455, 1, 0
    %v1457 = vlaneseq
    %v1458 = vshrl.u32 %v1457, 7
    %v1459 = vsub.s32 0, %v1458
    %v1460 = vrot.slane %v1456, %v1459
    %vm1461 = vcmp.eq.s32.totalorder %v1460, 1
    %v1462 = vsel %vm1461, %v1449, -1e+30
    %vm1463 = vcmask 162816
    %v1464 = vsel %vm1463, %v1462, -inf
    %1465 = vmax.xlane.f32.xlu0 %v1464
    %v1466 = vpop.xlane.xlu0 %1465
    %v1467 = vsub.f32 %v1449, %v1466
    %v1468 = vmul.f32 %v1467, 1.442695
    %v1469 = vpow.pop %v1468
    %v1470 = vld [vmem:[%s13] sm:$0xff]
    %v1471 = vld [vmem:[%s13 + $0x8] sm:$0xff]
    %v1472 = vld [vmem:[%s13 + $0x10] sm:$0xf]
    %v1474 = vsel %vm1463, %v1469, 0
    %v1477 = vsel %vm112, %v1472, 0
    %1479 = vmatprep.subr.mxu0 0.0
    %v1480 = vand.u32 %v1470, 4294901760
    %1481 = vmatpush1.msra.mxu0 %v1480
    %1482 = vmatprep.subr.mxu0 0.0
    %v1483 = vand.u32 %v1471, 4294901760
    %1484 = vmatpush1.msra.mxu0 %v1483
    %1485 = vmatprep.subr.mxu0 0.0
    %v1486 = vand.u32 %v1477, 4294901760
    %1487 = vmatpush1.msra.mxu0 %v1486
    %1488 = vmatprep.subr.mxu0 0.0
    %1489 = vmatpush1.msra.mxu0 0.0
    %1490 = vmatprep.subr.mxu0 0.0
    %1491 = vmatpush1.msra.mxu0 0.0
    %1492 = vmatprep.subr.mxu0 0.0
    %1493 = vmatpush1.msra.mxu0 0.0
    %1494 = vmatprep.subr.mxu0 0.0
    %1495 = vmatpush1.msra.mxu0 0.0
    %1496 = vmatprep.subr.mxu0 0.0
    %1497 = vmatpush1.msra.mxu0 0.0
    %1498 = vmatprep.subr.mxu0 0.0
    %1499 = vmatpush1.msra.mxu0 0.0
    %1500 = vmatprep.subr.mxu0 0.0
    %1501 = vmatpush1.msra.mxu0 0.0
    %1502 = vmatprep.subr.mxu0 0.0
    %1503 = vmatpush1.msra.mxu0 0.0
    %1504 = vmatprep.subr.mxu0 0.0
    %1505 = vmatpush1.msra.mxu0 0.0
    %1506 = vmatprep.subr.mxu0 0.0
    %1507 = vmatpush1.msra.mxu0 0.0
    %1508 = vmatprep.subr.mxu0 0.0
    %1509 = vmatpush1.msra.mxu0 0.0
    %1510 = vmatprep.subr.mxu0 0.0
    %1511 = vmatpush1.msra.mxu0 0.0
    %1512 = vmatprep.subr.mxu0 0.0
    %1513 = vmatpush1.msra.mxu0 0.0
    %1514 = vmatprep.subr.mxu0 0.0
    %1515 = vmatpush1.msra.mxu0 0.0
    %1516 = vmatprep.subr.mxu0 0.0
    %1517 = vmatpush1.msra.mxu0 0.0
    %1518 = vmatprep.subr.mxu0 0.0
    %1519 = vmatpush1.msra.mxu0 0.0
    %1520 = vmatprep.subr.mxu0 0.0
    %1521 = vmatpush1.msra.mxu0 0.0
    %1522 = vmatprep.subr.mxu0 0.0
    %1523 = vmatpush1.msra.mxu0 0.0
    %1524 = vmatprep.subr.mxu0 0.0
    %1525 = vmatpush1.msra.mxu0 0.0
    %1526 = vmatprep.subr.mxu0 0.0
    %1527 = vmatpush1.msra.mxu0 0.0
    %1528 = vmatprep.subr.mxu0 0.0
    %1529 = vmatpush1.msra.mxu0 0.0
    %1530 = vmatprep.subr.mxu0 0.0
    %1531 = vmatpush1.msra.mxu0 0.0
    %1532 = vmatprep.subr.mxu0 0.0
    %1533 = vmatpush1.msra.mxu0 0.0
    %1534 = vmatprep.subr.mxu0 0.0
    %1535 = vmatpush1.msra.mxu0 0.0
    %1536 = vmatprep.subr.mxu0 0.0
    %1537 = vmatpush1.msra.mxu0 0.0
    %1538 = vmatprep.subr.mxu0 0.0
    %1539 = vmatpush1.msra.mxu0 0.0
    %1540 = vmatprep.subr.mxu0 0.0
    %1541 = vmatpush1.msra.mxu0 0.0
    %1542 = vmatprep.subr.mxu0 0.0
    %1543 = vmatpush1.msra.mxu0 0.0
    %1544 = vmatprep.subr.mxu0 0.0
    %1545 = vmatpush1.msra.mxu0 0.0
    %1546 = vmatprep.mubr.f32.mxu0 0.0
    %v1547 = vand.u32 %v1474, 4294901760
    %v1548 = vsub.f32 %v1474, %v1547
    %v1549 = vand.u32 %v1548, 4294901760
    %v1550 = vsub.f32 %v1548, %v1549
    %v1551 = vand.u32 %v1550, 4294901760
    %1552 = vmatmul.mubr.f32.gmra.mrb[0].mxu0 %v1551
    %v1553 = vpop.f32.mrb[0].mxu0
    %v1554 = vadd.f32 0.0, %v1553
    %v1555 = vpop.f32.mrb[0].mxu0
    %1556 = vdwg.mxu0
    %1557 = vmatprep.subr.mxu0 0.0
    %v1558 = vand.u32 %v1470, 4294901760
    %v1559 = vsub.f32 %v1470, %v1558
    %v1560 = vand.u32 %v1559, 4294901760
    %v1561 = vsub.f32 %v1559, %v1560
    %v1562 = vand.u32 %v1561, 4294901760
    %1563 = vmatpush1.msra.mxu0 %v1562
    %1564 = vmatprep.subr.mxu0 0.0
    %v1565 = vand.u32 %v1471, 4294901760
    %v1566 = vsub.f32 %v1471, %v1565
    %v1567 = vand.u32 %v1566, 4294901760
    %v1568 = vsub.f32 %v1566, %v1567
    %v1569 = vand.u32 %v1568, 4294901760
    %1570 = vmatpush1.msra.mxu0 %v1569
    %1571 = vmatprep.subr.mxu0 0.0
    %v1572 = vand.u32 %v1477, 4294901760
    %v1573 = vsub.f32 %v1477, %v1572
    %v1574 = vand.u32 %v1573, 4294901760
    %v1575 = vsub.f32 %v1573, %v1574
    %v1576 = vand.u32 %v1575, 4294901760
    %1577 = vmatpush1.msra.mxu0 %v1576
    %1578 = vmatprep.subr.mxu0 0.0
    %1579 = vmatpush1.msra.mxu0 0.0
    %1580 = vmatprep.subr.mxu0 0.0
    %1581 = vmatpush1.msra.mxu0 0.0
    %1582 = vmatprep.subr.mxu0 0.0
    %1583 = vmatpush1.msra.mxu0 0.0
    %1584 = vmatprep.subr.mxu0 0.0
    %1585 = vmatpush1.msra.mxu0 0.0
    %1586 = vmatprep.subr.mxu0 0.0
    %1587 = vmatpush1.msra.mxu0 0.0
    %1588 = vmatprep.subr.mxu0 0.0
    %1589 = vmatpush1.msra.mxu0 0.0
    %1590 = vmatprep.subr.mxu0 0.0
    %1591 = vmatpush1.msra.mxu0 0.0
    %1592 = vmatprep.subr.mxu0 0.0
    %1593 = vmatpush1.msra.mxu0 0.0
    %1594 = vmatprep.subr.mxu0 0.0
    %1595 = vmatpush1.msra.mxu0 0.0
    %1596 = vmatprep.subr.mxu0 0.0
    %1597 = vmatpush1.msra.mxu0 0.0
    %1598 = vmatprep.subr.mxu0 0.0
    %1599 = vmatpush1.msra.mxu0 0.0
    %1600 = vmatprep.subr.mxu0 0.0
    %1601 = vmatpush1.msra.mxu0 0.0
    %1602 = vmatprep.subr.mxu0 0.0
    %1603 = vmatpush1.msra.mxu0 0.0
    %1604 = vmatprep.subr.mxu0 0.0
    %1605 = vmatpush1.msra.mxu0 0.0
    %1606 = vmatprep.subr.mxu0 0.0
    %1607 = vmatpush1.msra.mxu0 0.0
    %1608 = vmatprep.subr.mxu0 0.0
    %1609 = vmatpush1.msra.mxu0 0.0
    %1610 = vmatprep.subr.mxu0 0.0
    %1611 = vmatpush1.msra.mxu0 0.0
    %1612 = vmatprep.subr.mxu0 0.0
    %1613 = vmatpush1.msra.mxu0 0.0
    %1614 = vmatprep.subr.mxu0 0.0
    %1615 = vmatpush1.msra.mxu0 0.0
    %1616 = vmatprep.subr.mxu0 0.0
    %1617 = vmatpush1.msra.mxu0 0.0
    %1618 = vmatprep.subr.mxu0 0.0
    %1619 = vmatpush1.msra.mxu0 0.0
    %1620 = vmatprep.subr.mxu0 0.0
    %1621 = vmatpush1.msra.mxu0 0.0
    %1622 = vmatprep.subr.mxu0 0.0
    %1623 = vmatpush1.msra.mxu0 0.0
    %1624 = vmatprep.subr.mxu0 0.0
    %1625 = vmatpush1.msra.mxu0 0.0
    %1626 = vmatprep.subr.mxu0 0.0
    %1627 = vmatpush1.msra.mxu0 0.0
    %1628 = vmatprep.subr.mxu0 0.0
    %1629 = vmatpush1.msra.mxu0 0.0
    %1630 = vmatprep.subr.mxu0 0.0
    %1631 = vmatpush1.msra.mxu0 0.0
    %1632 = vmatprep.subr.mxu0 0.0
    %1633 = vmatpush1.msra.mxu0 0.0
    %1634 = vmatprep.subr.mxu0 0.0
    %1635 = vmatpush1.msra.mxu0 0.0
    %1636 = vmatprep.mubr.f32.mxu0 0.0
    %v1637 = vand.u32 %v1474, 4294901760
    %1638 = vmatmul.mubr.f32.gmra.mrb[0].mxu0 %v1637
    %v1639 = vpop.f32.mrb[0].mxu0
    %v1640 = vadd.f32 %v1554, %v1639
    %v1641 = vpop.f32.mrb[0].mxu0
    %1642 = vdwg.mxu0
    %1643 = vmatprep.subr.mxu0 0.0
    %v1644 = vand.u32 %v1470, 4294901760
    %v1645 = vsub.f32 %v1470, %v1644
    %1646 = vmatpush1.msra.mxu0 %v1645
    %1647 = vmatprep.subr.mxu0 0.0
    %v1648 = vand.u32 %v1471, 4294901760
    %v1649 = vsub.f32 %v1471, %v1648
    %1650 = vmatpush1.msra.mxu0 %v1649
    %1651 = vmatprep.subr.mxu0 0.0
    %v1652 = vand.u32 %v1477, 4294901760
    %v1653 = vsub.f32 %v1477, %v1652
    %1654 = vmatpush1.msra.mxu0 %v1653
    %1655 = vmatprep.subr.mxu0 0.0
    %1656 = vmatpush1.msra.mxu0 0.0
    %1657 = vmatprep.subr.mxu0 0.0
    %1658 = vmatpush1.msra.mxu0 0.0
    %1659 = vmatprep.subr.mxu0 0.0
    %1660 = vmatpush1.msra.mxu0 0.0
    %1661 = vmatprep.subr.mxu0 0.0
    %1662 = vmatpush1.msra.mxu0 0.0
    %1663 = vmatprep.subr.mxu0 0.0
    %1664 = vmatpush1.msra.mxu0 0.0
    %1665 = vmatprep.subr.mxu0 0.0
    %1666 = vmatpush1.msra.mxu0 0.0
    %1667 = vmatprep.subr.mxu0 0.0
    %1668 = vmatpush1.msra.mxu0 0.0
    %1669 = vmatprep.subr.mxu0 0.0
    %1670 = vmatpush1.msra.mxu0 0.0
    %1671 = vmatprep.subr.mxu0 0.0
    %1672 = vmatpush1.msra.mxu0 0.0
    %1673 = vmatprep.subr.mxu0 0.0
    %1674 = vmatpush1.msra.mxu0 0.0
    %1675 = vmatprep.subr.mxu0 0.0
    %1676 = vmatpush1.msra.mxu0 0.0
    %1677 = vmatprep.subr.mxu0 0.0
    %1678 = vmatpush1.msra.mxu0 0.0
    %1679 = vmatprep.subr.mxu0 0.0
    %1680 = vmatpush1.msra.mxu0 0.0
    %1681 = vmatprep.subr.mxu0 0.0
    %1682 = vmatpush1.msra.mxu0 0.0
    %1683 = vmatprep.subr.mxu0 0.0
    %1684 = vmatpush1.msra.mxu0 0.0
    %1685 = vmatprep.subr.mxu0 0.0
    %1686 = vmatpush1.msra.mxu0 0.0
    %1687 = vmatprep.subr.mxu0 0.0
    %1688 = vmatpush1.msra.mxu0 0.0
    %1689 = vmatprep.subr.mxu0 0.0
    %1690 = vmatpush1.msra.mxu0 0.0
    %1691 = vmatprep.subr.mxu0 0.0
    %1692 = vmatpush1.msra.mxu0 0.0
    %1693 = vmatprep.subr.mxu0 0.0
    %1694 = vmatpush1.msra.mxu0 0.0
    %1695 = vmatprep.subr.mxu0 0.0
    %1696 = vmatpush1.msra.mxu0 0.0
    %1697 = vmatprep.subr.mxu0 0.0
    %1698 = vmatpush1.msra.mxu0 0.0
    %1699 = vmatprep.subr.mxu0 0.0
    %1700 = vmatpush1.msra.mxu0 0.0
    %1701 = vmatprep.subr.mxu0 0.0
    %1702 = vmatpush1.msra.mxu0 0.0
    %1703 = vmatprep.subr.mxu0 0.0
    %1704 = vmatpush1.msra.mxu0 0.0
    %1705 = vmatprep.subr.mxu0 0.0
    %1706 = vmatpush1.msra.mxu0 0.0
    %1707 = vmatprep.subr.mxu0 0.0
    %1708 = vmatpush1.msra.mxu0 0.0
    %1709 = vmatprep.subr.mxu0 0.0
    %1710 = vmatpush1.msra.mxu0 0.0
    %1711 = vmatprep.subr.mxu0 0.0
    %1712 = vmatpush1.msra.mxu0 0.0
    %1713 = vmatprep.mubr.f32.mxu0 0.0
    %v1714 = vand.u32 %v1474, 4294901760
    %v1715 = vsub.f32 %v1474, %v1714
    %1716 = vmatmul.mubr.f32.gmra.mrb[0].mxu0 %v1715
    %v1717 = vpop.f32.mrb[0].mxu0
    %v1718 = vadd.f32 %v1640, %v1717
    %v1719 = vpop.f32.mrb[0].mxu0
    %1720 = vdwg.mxu0
    %1721 = vmatprep.subr.mxu0 0.0
    %v1722 = vand.u32 %v1470, 4294901760
    %1723 = vmatpush1.msra.mxu0 %v1722
    %1724 = vmatprep.subr.mxu0 0.0
    %v1725 = vand.u32 %v1471, 4294901760
    %1726 = vmatpush1.msra.mxu0 %v1725
    %1727 = vmatprep.subr.mxu0 0.0
    %v1728 = vand.u32 %v1477, 4294901760
    %1729 = vmatpush1.msra.mxu0 %v1728
    %1730 = vmatprep.subr.mxu0 0.0
    %1731 = vmatpush1.msra.mxu0 0.0
    %1732 = vmatprep.subr.mxu0 0.0
    %1733 = vmatpush1.msra.mxu0 0.0
    %1734 = vmatprep.subr.mxu0 0.0
    %1735 = vmatpush1.msra.mxu0 0.0
    %1736 = vmatprep.subr.mxu0 0.0
    %1737 = vmatpush1.msra.mxu0 0.0
    %1738 = vmatprep.subr.mxu0 0.0
    %1739 = vmatpush1.msra.mxu0 0.0
    %1740 = vmatprep.subr.mxu0 0.0
    %1741 = vmatpush1.msra.mxu0 0.0
    %1742 = vmatprep.subr.mxu0 0.0
    %1743 = vmatpush1.msra.mxu0 0.0
    %1744 = vmatprep.subr.mxu0 0.0
    %1745 = vmatpush1.msra.mxu0 0.0
    %1746 = vmatprep.subr.mxu0 0.0
    %1747 = vmatpush1.msra.mxu0 0.0
    %1748 = vmatprep.subr.mxu0 0.0
    %1749 = vmatpush1.msra.mxu0 0.0
    %1750 = vmatprep.subr.mxu0 0.0
    %1751 = vmatpush1.msra.mxu0 0.0
    %1752 = vmatprep.subr.mxu0 0.0
    %1753 = vmatpush1.msra.mxu0 0.0
    %1754 = vmatprep.subr.mxu0 0.0
    %1755 = vmatpush1.msra.mxu0 0.0
    %1756 = vmatprep.subr.mxu0 0.0
    %1757 = vmatpush1.msra.mxu0 0.0
    %1758 = vmatprep.subr.mxu0 0.0
    %1759 = vmatpush1.msra.mxu0 0.0
    %1760 = vmatprep.subr.mxu0 0.0
    %1761 = vmatpush1.msra.mxu0 0.0
    %1762 = vmatprep.subr.mxu0 0.0
    %1763 = vmatpush1.msra.mxu0 0.0
    %1764 = vmatprep.subr.mxu0 0.0
    %1765 = vmatpush1.msra.mxu0 0.0
    %1766 = vmatprep.subr.mxu0 0.0
    %1767 = vmatpush1.msra.mxu0 0.0
    %1768 = vmatprep.subr.mxu0 0.0
    %1769 = vmatpush1.msra.mxu0 0.0
    %1770 = vmatprep.subr.mxu0 0.0
    %1771 = vmatpush1.msra.mxu0 0.0
    %1772 = vmatprep.subr.mxu0 0.0
    %1773 = vmatpush1.msra.mxu0 0.0
    %1774 = vmatprep.subr.mxu0 0.0
    %1775 = vmatpush1.msra.mxu0 0.0
    %1776 = vmatprep.subr.mxu0 0.0
    %1777 = vmatpush1.msra.mxu0 0.0
    %1778 = vmatprep.subr.mxu0 0.0
    %1779 = vmatpush1.msra.mxu0 0.0
    %1780 = vmatprep.subr.mxu0 0.0
    %1781 = vmatpush1.msra.mxu0 0.0
    %1782 = vmatprep.subr.mxu0 0.0
    %1783 = vmatpush1.msra.mxu0 0.0
    %1784 = vmatprep.subr.mxu0 0.0
    %1785 = vmatpush1.msra.mxu0 0.0
    %1786 = vmatprep.subr.mxu0 0.0
    %1787 = vmatpush1.msra.mxu0 0.0
    %1788 = vmatprep.mubr.f32.mxu0 0.0
    %v1789 = vand.u32 %v1474, 4294901760
    %v1790 = vsub.f32 %v1474, %v1789
    %v1791 = vand.u32 %v1790, 4294901760
    %1792 = vmatmul.mubr.f32.gmra.mrb[0].mxu0 %v1791
    %v1793 = vpop.f32.mrb[0].mxu0
    %v1794 = vadd.f32 %v1718, %v1793
    %v1795 = vpop.f32.mrb[0].mxu0
    %1796 = vdwg.mxu0
    %1797 = vmatprep.subr.mxu0 0.0
    %v1798 = vand.u32 %v1470, 4294901760
    %v1799 = vsub.f32 %v1470, %v1798
    %v1800 = vand.u32 %v1799, 4294901760
    %1801 = vmatpush1.msra.mxu0 %v1800
    %1802 = vmatprep.subr.mxu0 0.0
    %v1803 = vand.u32 %v1471, 4294901760
    %v1804 = vsub.f32 %v1471, %v1803
    %v1805 = vand.u32 %v1804, 4294901760
    %1806 = vmatpush1.msra.mxu0 %v1805
    %1807 = vmatprep.subr.mxu0 0.0
    %v1808 = vand.u32 %v1477, 4294901760
    %v1809 = vsub.f32 %v1477, %v1808
    %v1810 = vand.u32 %v1809, 4294901760
    %1811 = vmatpush1.msra.mxu0 %v1810
    %1812 = vmatprep.subr.mxu0 0.0
    %1813 = vmatpush1.msra.mxu0 0.0
    %1814 = vmatprep.subr.mxu0 0.0
    %1815 = vmatpush1.msra.mxu0 0.0
    %1816 = vmatprep.subr.mxu0 0.0
    %1817 = vmatpush1.msra.mxu0 0.0
    %1818 = vmatprep.subr.mxu0 0.0
    %1819 = vmatpush1.msra.mxu0 0.0
    %1820 = vmatprep.subr.mxu0 0.0
    %1821 = vmatpush1.msra.mxu0 0.0
    %1822 = vmatprep.subr.mxu0 0.0
    %1823 = vmatpush1.msra.mxu0 0.0
    %1824 = vmatprep.subr.mxu0 0.0
    %1825 = vmatpush1.msra.mxu0 0.0
    %1826 = vmatprep.subr.mxu0 0.0
    %1827 = vmatpush1.msra.mxu0 0.0
    %1828 = vmatprep.subr.mxu0 0.0
    %1829 = vmatpush1.msra.mxu0 0.0
    %1830 = vmatprep.subr.mxu0 0.0
    %1831 = vmatpush1.msra.mxu0 0.0
    %1832 = vmatprep.subr.mxu0 0.0
    %1833 = vmatpush1.msra.mxu0 0.0
    %1834 = vmatprep.subr.mxu0 0.0
    %1835 = vmatpush1.msra.mxu0 0.0
    %1836 = vmatprep.subr.mxu0 0.0
    %1837 = vmatpush1.msra.mxu0 0.0
    %1838 = vmatprep.subr.mxu0 0.0
    %1839 = vmatpush1.msra.mxu0 0.0
    %1840 = vmatprep.subr.mxu0 0.0
    %1841 = vmatpush1.msra.mxu0 0.0
    %1842 = vmatprep.subr.mxu0 0.0
    %1843 = vmatpush1.msra.mxu0 0.0
    %1844 = vmatprep.subr.mxu0 0.0
    %1845 = vmatpush1.msra.mxu0 0.0
    %1846 = vmatprep.subr.mxu0 0.0
    %1847 = vmatpush1.msra.mxu0 0.0
    %1848 = vmatprep.subr.mxu0 0.0
    %1849 = vmatpush1.msra.mxu0 0.0
    %1850 = vmatprep.subr.mxu0 0.0
    %1851 = vmatpush1.msra.mxu0 0.0
    %1852 = vmatprep.subr.mxu0 0.0
    %1853 = vmatpush1.msra.mxu0 0.0
    %1854 = vmatprep.subr.mxu0 0.0
    %1855 = vmatpush1.msra.mxu0 0.0
    %1856 = vmatprep.subr.mxu0 0.0
    %1857 = vmatpush1.msra.mxu0 0.0
    %1858 = vmatprep.subr.mxu0 0.0
    %1859 = vmatpush1.msra.mxu0 0.0
    %1860 = vmatprep.subr.mxu0 0.0
    %1861 = vmatpush1.msra.mxu0 0.0
    %1862 = vmatprep.subr.mxu0 0.0
    %1863 = vmatpush1.msra.mxu0 0.0
    %1864 = vmatprep.subr.mxu0 0.0
    %1865 = vmatpush1.msra.mxu0 0.0
    %1866 = vmatprep.subr.mxu0 0.0
    %1867 = vmatpush1.msra.mxu0 0.0
    %1868 = vmatprep.subr.mxu0 0.0
    %1869 = vmatpush1.msra.mxu0 0.0
    %1870 = vmatprep.mubr.f32.mxu0 0.0
    %v1871 = vand.u32 %v1474, 4294901760
    %1872 = vmatmul.mubr.f32.gmra.mrb[0].mxu0 %v1871
    %v1873 = vpop.f32.mrb[0].mxu0
    %v1874 = vadd.f32 %v1794, %v1873
    %v1875 = vpop.f32.mrb[0].mxu0
    %1876 = vdwg.mxu0
    %1877 = vmatprep.subr.mxu0 0.0
    %v1878 = vand.u32 %v1470, 4294901760
    %1879 = vmatpush1.msra.mxu0 %v1878
    %1880 = vmatprep.subr.mxu0 0.0
    %v1881 = vand.u32 %v1471, 4294901760
    %1882 = vmatpush1.msra.mxu0 %v1881
    %1883 = vmatprep.subr.mxu0 0.0
    %v1884 = vand.u32 %v1477, 4294901760
    %1885 = vmatpush1.msra.mxu0 %v1884
    %1886 = vmatprep.subr.mxu0 0.0
    %1887 = vmatpush1.msra.mxu0 0.0
    %1888 = vmatprep.subr.mxu0 0.0
    %1889 = vmatpush1.msra.mxu0 0.0
    %1890 = vmatprep.subr.mxu0 0.0
    %1891 = vmatpush1.msra.mxu0 0.0
    %1892 = vmatprep.subr.mxu0 0.0
    %1893 = vmatpush1.msra.mxu0 0.0
    %1894 = vmatprep.subr.mxu0 0.0
    %1895 = vmatpush1.msra.mxu0 0.0
    %1896 = vmatprep.subr.mxu0 0.0
    %1897 = vmatpush1.msra.mxu0 0.0
    %1898 = vmatprep.subr.mxu0 0.0
    %1899 = vmatpush1.msra.mxu0 0.0
    %1900 = vmatprep.subr.mxu0 0.0
    %1901 = vmatpush1.msra.mxu0 0.0
    %1902 = vmatprep.subr.mxu0 0.0
    %1903 = vmatpush1.msra.mxu0 0.0
    %1904 = vmatprep.subr.mxu0 0.0
    %1905 = vmatpush1.msra.mxu0 0.0
    %1906 = vmatprep.subr.mxu0 0.0
    %1907 = vmatpush1.msra.mxu0 0.0
    %1908 = vmatprep.subr.mxu0 0.0
    %1909 = vmatpush1.msra.mxu0 0.0
    %1910 = vmatprep.subr.mxu0 0.0
    %1911 = vmatpush1.msra.mxu0 0.0
    %1912 = vmatprep.subr.mxu0 0.0
    %1913 = vmatpush1.msra.mxu0 0.0
    %1914 = vmatprep.subr.mxu0 0.0
    %1915 = vmatpush1.msra.mxu0 0.0
    %1916 = vmatprep.subr.mxu0 0.0
    %1917 = vmatpush1.msra.mxu0 0.0
    %1918 = vmatprep.subr.mxu0 0.0
    %1919 = vmatpush1.msra.mxu0 0.0
    %1920 = vmatprep.subr.mxu0 0.0
    %1921 = vmatpush1.msra.mxu0 0.0
    %1922 = vmatprep.subr.mxu0 0.0
    %1923 = vmatpush1.msra.mxu0 0.0
    %1924 = vmatprep.subr.mxu0 0.0
    %1925 = vmatpush1.msra.mxu0 0.0
    %1926 = vmatprep.subr.mxu0 0.0
    %1927 = vmatpush1.msra.mxu0 0.0
    %1928 = vmatprep.subr.mxu0 0.0
    %1929 = vmatpush1.msra.mxu0 0.0
    %1930 = vmatprep.subr.mxu0 0.0
    %1931 = vmatpush1.msra.mxu0 0.0
    %1932 = vmatprep.subr.mxu0 0.0
    %1933 = vmatpush1.msra.mxu0 0.0
    %1934 = vmatprep.subr.mxu0 0.0
    %1935 = vmatpush1.msra.mxu0 0.0
    %1936 = vmatprep.subr.mxu0 0.0
    %1937 = vmatpush1.msra.mxu0 0.0
    %1938 = vmatprep.subr.mxu0 0.0
    %1939 = vmatpush1.msra.mxu0 0.0
    %1940 = vmatprep.subr.mxu0 0.0
    %1941 = vmatpush1.msra.mxu0 0.0
    %1942 = vmatprep.subr.mxu0 0.0
    %1943 = vmatpush1.msra.mxu0 0.0
    %1944 = vmatprep.mubr.f32.mxu0 0.0
    %v1945 = vand.u32 %v1474, 4294901760
    %1946 = vmatmul.mubr.f32.gmra.mrb[0].mxu0 %v1945
    %v1947 = vpop.f32.mrb[0].mxu0
    %v1948 = vadd.f32 %v1874, %v1947
    %v1949 = vpop.f32.mrb[0].mxu0
    %1950 = vdwg.mxu0
    %v1951 = vrcp.pop %v1948
    %v1952 = vmul.f32 %v1469, %v1951
    %v1953 = vxor.u32 %v1449, 2147483648
    %v1954 = vmul.f32 %v1953, 1.442695
    %v1955 = vpow.pop %v1954
    %v1956 = vadd.f32 %v1955, 1.0
    %v1957 = vrcp.pop %v1956
    %v1958 = vmul.f32 1.0, %v1957
    %v1959 = vsel %vm1461, %v1952, %v1958
    %1960 = vst.msk [vmem:[#allocation7] sm:$0xff] %vm1463, %v1959
    // Predicated region
    $region70: #{tpu_custom_call.1} parent=1 // pred_check
      _
    $region71: #{tpu_custom_call.1} parent=1 // pred_check_branch
      %1962 = sbr.rel (0) target = $region73
    $region72: #{tpu_custom_call.1} parent=1 // pred_region
      %s1964 = ssub.s32 128, 128
      %1965 = vsyncadd [#allocation4], %s1964
      %s1967 = sshll.u32 [#allocation7], 4
      %s1968 = int_to_ptr.vmem [resolvable:$true] %s1967
      %1970 = dma.vmem_to_hbm [thread:$0]  %s1968, 128, %s15, [#allocation4]
    $region73: #{tpu_custom_call.1} parent=1 // pred_fallthru
      _
    // Predicated region
    $region74: #{tpu_custom_call.1} parent=1 // pred_check
      _
    $region75: #{tpu_custom_call.1} parent=1 // pred_check_branch
      %1972 = sbr.rel (0) target = $region77
    $region76: #{tpu_custom_call.1} parent=1 // pred_region
      %1973 = dma.done [#allocation4], 128
    $region77: #{tpu_custom_call.1} parent=1 // pred_fallthru
      _
    %1974 = vsyncpa [#allocation3], 1
    %1975 = vsyncpa [#allocation6], 1
    %1976 = vsyncpa [#allocation4], 1

</llo_original>
